<compile_context>
chip_gen: v6e
topology: v6e:2x2x1
jax: 0.10.0
libtpu: 0.0.40
codegen_flags: <defaults>
</compile_context>

<pallas_src>
import numpy as np
import jax
import jax.numpy as jnp
from jax import lax
from jax.experimental import pallas as pl
from jax.experimental.pallas import tpu as pltpu

NEG = -1e30  # "-inf" stand-in for max-pool padding (safe for f32 activations)


def _make_block_kernel(H, C_out, WC):
    """Kernel over one block of Nb sublane-stacked images, layout (Nb*H, W*C)."""

    def kernel(x_ref, b1_ref, bn1b_ref, b2_ref, bn2b_ref,
               rsh_ref, lsh_ref, skipmat_ref, skb_ref, rowsel_ref, o_ref):
        x = x_ref[...]                                   # (M, W*Cp)
        M = x.shape[0]

        rup = rsh_ref[0]                                 # (M, M): out[r] = in[r-1], 0 at image top
        rdn = rsh_ref[1]                                 # (M, M): out[r] = in[r+1], 0 at image bottom

        def mm(a, b):
            return jnp.dot(a, b, preferred_element_type=jnp.float32)

        def sepconv(h, b_ref):
            # fused depthwise 3x3 + pointwise 1x1 + BN scale: 3 banded matmuls on the MXU,
            # vertical taps via tiny row-shift permutation matmuls (boundary zeros baked in).
            out = mm(h, b_ref[1])                        # ky = 1 (center row)
            out = out + mm(mm(rup, h), b_ref[0])         # ky = 0 (row r-1)
            out = out + mm(mm(rdn, h), b_ref[2])         # ky = 2 (row r+1)
            return out

        # ---------------- rep path ----------------
        h = jnp.maximum(x, 0.0)                          # ReLU
        h = sepconv(h, b1_ref) + bn1b_ref[...]           # SepConv1 + BN1
        h = jnp.maximum(h, 0.0)                          # ReLU
        h = sepconv(h, b2_ref) + bn2b_ref[...]           # SepConv2 + BN2

        # ---- MaxPool2d(3, stride=2, pad=1): separable stride-1 3x3 max first ----
        rid = lax.broadcasted_iota(jnp.int32, (M, 1), 0) % H
        top = rid == 0                                   # first row of each stacked image
        bot = rid == (H - 1)                             # last row of each stacked image
        cid = lax.broadcasted_iota(jnp.int32, (1, WC), 1)
        cfirst = cid < C_out                             # column w = 0
        clast = cid >= (WC - C_out)                      # column w = W-1

        lm = jnp.where(cfirst, NEG, mm(h, lsh_ref[0]))   # value from column w-1
        rm = jnp.where(clast, NEG, mm(h, lsh_ref[1]))    # value from column w+1
        hm = jnp.maximum(jnp.maximum(h, lm), rm)
        um = jnp.where(top, NEG, mm(rup, hm))            # value from row r-1
        dm = jnp.where(bot, NEG, mm(rdn, hm))            # value from row r+1
        m = jnp.maximum(jnp.maximum(hm, um), dm)         # (M, W*C_out), stride-1 pooled

        # ---- fused epilogue: skip 1x1 (all columns) + even-row selection, lane-dense store ----
        pre = m + mm(x, skipmat_ref[...])                # pool + skip (full rows / columns)
        o_ref[...] = mm(rowsel_ref[...], pre) + skb_ref[...]

    return kernel


def prepare_params(p, *, H, W, images_per_block):
    """One-time weight/layout preparation (hoisted out of the jitted forward)."""
    dw1 = np.asarray(p["dw1"], np.float32)               # (3, 3, C_in)
    pw1 = np.asarray(p["pw1"], np.float32)               # (C_in, C_out)
    dw2 = np.asarray(p["dw2"], np.float32)               # (3, 3, C_out)
    pw2 = np.asarray(p["pw2"], np.float32)               # (C_out, C_out)
    skw = np.asarray(p["skw"], np.float32)               # (C_in, C_out)
    bn1s, bn1b = np.asarray(p["bn1s"], np.float32), np.asarray(p["bn1b"], np.float32)
    bn2s, bn2b = np.asarray(p["bn2s"], np.float32), np.asarray(p["bn2b"], np.float32)
    sks, skb = np.asarray(p["sks"], np.float32), np.asarray(p["skb"], np.float32)

    C_in, C_out = pw1.shape
    Cp = max(C_in, C_out)
    Nb = images_per_block
    Ho = (H + 2 - 3) // 2 + 1
    M, Mo, WC = Nb * H, Nb * Ho, W * C_out

    # fold inference-mode BN scales into the pointwise / skip weights
    pw1s = np.zeros((Cp, C_out), np.float32); pw1s[:C_in] = pw1 * bn1s[None, :]
    pw2s = pw2 * bn2s[None, :]
    skws = np.zeros((Cp, C_out), np.float32); skws[:C_in] = skw * sks[None, :]
    dw1p = np.zeros((3, 3, Cp), np.float32);  dw1p[:, :, :C_in] = dw1

    # fused depthwise-3x3 + pointwise banded matrices: one (W*Ci, W*Co) matrix per ky
    def banded(dw, pwmat):
        Ci, Co = pwmat.shape
        mats = np.zeros((3, W * Ci, W * Co), np.float32)
        for ky in range(3):
            for kx in range(3):
                blk = dw[ky, kx][:, None] * pwmat        # (Ci, Co)
                for wo in range(W):
                    wi = wo + kx - 1
                    if 0 <= wi < W:
                        mats[ky, wi * Ci:(wi + 1) * Ci, wo * Co:(wo + 1) * Co] = blk
        return mats

    b1 = banded(dw1p, pw1s)                              # (3, W*Cp,    W*C_out)
    b2 = banded(dw2, pw2s)                               # (3, W*C_out, W*C_out)

    # row-shift permutation matrices with per-image boundary zeros (batch folded on sublanes)
    rsh = np.zeros((2, M, M), np.float32)
    for r in range(M):
        if r % H != 0:
            rsh[0, r, r - 1] = 1.0                       # out[r] = in[r-1]
        if r % H != H - 1:
            rsh[1, r, r + 1] = 1.0                       # out[r] = in[r+1]

    # lane-shift (one image column = C_out lanes) permutation matrices for the max pool
    lsh = np.zeros((2, WC, WC), np.float32)
    for l in range(WC - C_out):
        lsh[0, l, l + C_out] = 1.0                       # out lane l+C <- in lane l   (col w-1)
        lsh[1, l + C_out, l] = 1.0                       # out lane l   <- in lane l+C (col w+1)

    # skip path: block-diagonal 1x1 conv (BN scale folded), evaluated at every column
    skipmat = np.kron(np.eye(W, dtype=np.float32), skws)   # (W*Cp, W*C_out)

    # per-image even-row selection (stride-2 row subsampling for pool & skip)
    rowsel = np.zeros((Mo, M), np.float32)
    for i in range(Nb):
        for r in range(Ho):
            rowsel[i * Ho + r, i * H + 2 * r] = 1.0

    # lane-tiled biases
    bn1bt = np.tile(bn1b, W)[None, :]
    bn2bt = np.tile(bn2b, W)[None, :]
    skbt = np.tile(skb, W)[None, :]

    prep = dict(b1=b1, bn1b=bn1bt, b2=b2, bn2b=bn2bt, rsh=rsh, lsh=lsh,
                skipmat=skipmat, skb=skbt, rowsel=rowsel)
    return {k: jnp.asarray(v) for k, v in prep.items()}


@jax.jit
def block_forward(x_nhwc, prep):
    """x_nhwc: (N, H, W, C_in) f32.  Returns (N, Ho, Wo, C_out) f32."""
    N, H, W, C_in = x_nhwc.shape
    Mo, M = prep["rowsel"].shape
    Nb = M // H
    Ho = Mo // Nb
    WC = prep["bn1b"].shape[1]
    C_out = WC // W
    WCp = prep["skipmat"].shape[0]
    Cp = WCp // W
    assert N % Nb == 0, "batch must be divisible by images_per_block"
    G = N // Nb

    # lane-dense activations, Nb images stacked along the sublane axis per block
    x2 = jnp.pad(x_nhwc, ((0, 0), (0, 0), (0, 0), (0, Cp - C_in)))
    x2 = x2.reshape(N * H, WCp)

    kernel = _make_block_kernel(H=H, C_out=C_out, WC=WC)

    def fixed(shape):
        nd = len(shape)
        # grid-invariant weights; Pallas skips re-fetching blocks whose index doesn't change.
        return pl.BlockSpec(shape, lambda b, _nd=nd: (0,) * _nd)

    out2d = pl.pallas_call(
        kernel,
        out_shape=jax.ShapeDtypeStruct((N * Ho, WC), jnp.float32),
        grid=(G,),
        in_specs=[
            pl.BlockSpec((M, WCp), lambda b: (b, 0)),    # activations (Nb images / block)
            fixed((3, WCp, WC)),                         # sepconv1 banded (dw+pw+BN1 scale)
            fixed((1, WC)),                              # BN1 bias (lane tiled)
            fixed((3, WC, WC)),                          # sepconv2 banded (dw+pw+BN2 scale)
            fixed((1, WC)),                              # BN2 bias (lane tiled)
            fixed((2, M, M)),                            # row-shift perms (image-boundary zeros)
            fixed((2, WC, WC)),                          # lane-shift perms for max pool
            fixed((WCp, WC)),                            # skip 1x1 (BN scale folded)
            fixed((1, WC)),                              # skip BN bias (lane tiled)
            fixed((Mo, M)),                              # per-image even-row selection
        ],
        out_specs=pl.BlockSpec((Mo, WC), lambda b: (b, 0)),   # lane-dense output slab
        compiler_params=pltpu.CompilerParams(
            dimension_semantics=("parallel",)),
    )(x2, prep["b1"], prep["bn1b"], prep["b2"], prep["bn2b"],
      prep["rsh"], prep["lsh"], prep["skipmat"], prep["skb"], prep["rowsel"])

    # drop the odd output columns (kept in-kernel only to keep the store lane-dense)
    return out2d.reshape(N, Ho, W, C_out)[:, :, ::2, :]


def ref_forward(x_nhwc, p):
    """Pure-JAX reference (NHWC) mirroring Block.forward in eval mode."""
    def dwconv(h, dw):
        C = h.shape[-1]
        return lax.conv_general_dilated(
            h, dw.reshape(3, 3, 1, C), (1, 1), ((1, 1), (1, 1)),
            dimension_numbers=("NHWC", "HWIO", "NHWC"), feature_group_count=C)

    def pwconv(h, w):
        return jnp.einsum("nhwc,co->nhwo", h, w)

    h = jax.nn.relu(x_nhwc)
    h = pwconv(dwconv(h, p["dw1"]), p["pw1"])
    h = h * p["bn1s"] + p["bn1b"]
    h = jax.nn.relu(h)
    h = pwconv(dwconv(h, p["dw2"]), p["pw2"])
    h = h * p["bn2s"] + p["bn2b"]
    h = lax.reduce_window(h, -jnp.inf, lax.max, (1, 3, 3, 1), (1, 2, 2, 1),
                          ((0, 0), (1, 1), (1, 1), (0, 0)))
    y = x_nhwc[:, ::2, ::2, :]
    y = jnp.einsum("nhwc,co->nhwo", y, p["skw"])
    y = y * p["sks"] + p["skb"]
    return h + y


if __name__ == "__main__":
    N, C_in, H, W = 2, 4, 16, 16
    C_out = 8

    key = jax.random.PRNGKey(0)
    ks = jax.random.split(key, 20)

    # PyTorch-style NCHW input, transposed to NHWC for the kernel (layout glue).
    x_nchw = jax.random.normal(ks[0], (N, C_in, H, W), jnp.float32)
    x = jnp.transpose(x_nchw, (0, 2, 3, 1))

    def bn_fold(kg, kb, km, kv, C):
        gamma = jax.random.uniform(kg, (C,), minval=0.5, maxval=1.5)
        beta = 0.1 * jax.random.normal(kb, (C,))
        mean = 0.1 * jax.random.normal(km, (C,))
        var = jax.random.uniform(kv, (C,), minval=0.5, maxval=1.5)
        scale = (gamma / jnp.sqrt(var + 1e-5)).astype(jnp.float32)
        bias = (beta - mean * scale).astype(jnp.float32)
        return scale, bias

    params = {
        "dw1": 0.2 * jax.random.normal(ks[1], (3, 3, C_in), jnp.float32),
        "pw1": 0.2 * jax.random.normal(ks[2], (C_in, C_out), jnp.float32),
        "dw2": 0.2 * jax.random.normal(ks[3], (3, 3, C_out), jnp.float32),
        "pw2": 0.2 * jax.random.normal(ks[4], (C_out, C_out), jnp.float32),
        "skw": 0.2 * jax.random.normal(ks[5], (C_in, C_out), jnp.float32),
    }
    params["bn1s"], params["bn1b"] = bn_fold(ks[6], ks[7], ks[8], ks[9], C_out)
    params["bn2s"], params["bn2b"] = bn_fold(ks[10], ks[11], ks[12], ks[13], C_out)
    params["sks"], params["skb"] = bn_fold(ks[14], ks[15], ks[16], ks[17], C_out)

    # Batch folding policy (perf review): fold images into one block to amortize
    # per-grid-step overhead; keep 2 parallel grid steps (v7x's 2 TCs) only when
    # each step still gets >= 2 images.
    images_per_block = N // 2 if (N % 2 == 0 and N >= 4) else N

    prep = prepare_params(params, H=H, W=W, images_per_block=images_per_block)

    out = jax.block_until_ready(block_forward(x, prep))
    ref = jax.block_until_ready(ref_forward(x, params))

    assert out.shape == (N, 8, 8, C_out), out.shape
    max_err = float(jnp.max(jnp.abs(out - ref)))
    assert max_err < 1e-3, f"mismatch vs reference: {max_err}"

    print("KERNEL_OK")
</pallas_src>

<mosaic_0001>
module attributes {stable_mosaic.version = 11 : i64} {
  func.func @kernel(%arg0: i32, %arg1: memref<32x128xf32, #tpu.memory_space<vmem>>, %arg2: memref<3x128x128xf32, #tpu.memory_space<vmem>>, %arg3: memref<1x128xf32, #tpu.memory_space<vmem>>, %arg4: memref<3x128x128xf32, #tpu.memory_space<vmem>>, %arg5: memref<1x128xf32, #tpu.memory_space<vmem>>, %arg6: memref<2x32x32xf32, #tpu.memory_space<vmem>>, %arg7: memref<2x128x128xf32, #tpu.memory_space<vmem>>, %arg8: memref<128x128xf32, #tpu.memory_space<vmem>>, %arg9: memref<1x128xf32, #tpu.memory_space<vmem>>, %arg10: memref<16x32xf32, #tpu.memory_space<vmem>>, %arg11: memref<16x128xf32, #tpu.memory_space<vmem>>) attributes {dimension_semantics = [#tpu.dimension_semantics<parallel>], iteration_bounds = array<i64: 1>, scalar_prefetch = 0 : i64, scratch_operands = 0 : i64, tpu.core_type = #tpu.core_type<tc>, window_params = [{transform_indices = @transform_0, window_bounds = array<i64: 32, 128>}, {pipeline_mode = #tpu.pipeline_mode<synchronous>, transform_indices = @transform_1, window_bounds = array<i64: 3, 128, 128>}, {pipeline_mode = #tpu.pipeline_mode<synchronous>, transform_indices = @transform_2, window_bounds = array<i64: 1, 128>}, {pipeline_mode = #tpu.pipeline_mode<synchronous>, transform_indices = @transform_3, window_bounds = array<i64: 3, 128, 128>}, {pipeline_mode = #tpu.pipeline_mode<synchronous>, transform_indices = @transform_4, window_bounds = array<i64: 1, 128>}, {pipeline_mode = #tpu.pipeline_mode<synchronous>, transform_indices = @transform_5, window_bounds = array<i64: 2, 32, 32>}, {pipeline_mode = #tpu.pipeline_mode<synchronous>, transform_indices = @transform_6, window_bounds = array<i64: 2, 128, 128>}, {pipeline_mode = #tpu.pipeline_mode<synchronous>, transform_indices = @transform_7, window_bounds = array<i64: 128, 128>}, {pipeline_mode = #tpu.pipeline_mode<synchronous>, transform_indices = @transform_8, window_bounds = array<i64: 1, 128>}, {pipeline_mode = #tpu.pipeline_mode<synchronous>, transform_indices = @transform_9, window_bounds = array<i64: 16, 32>}, {transform_indices = @transform_10, window_bounds = array<i64: 16, 128>}]} {
    %c0 = arith.constant 0 : index
    %c0_0 = arith.constant 0 : index
    %0 = vector.load %arg1[%c0, %c0_0] : memref<32x128xf32, #tpu.memory_space<vmem>>, vector<32x128xf32>
    %c0_1 = arith.constant 0 : index
    %c0_2 = arith.constant 0 : index
    %c0_3 = arith.constant 0 : index
    %1 = vector.load %arg6[%c0_1, %c0_2, %c0_3] : memref<2x32x32xf32, #tpu.memory_space<vmem>>, vector<1x32x32xf32>
    %2 = vector.shape_cast %1 : vector<1x32x32xf32> to vector<32x32xf32>
    %c1 = arith.constant 1 : index
    %c0_4 = arith.constant 0 : index
    %c0_5 = arith.constant 0 : index
    %3 = vector.load %arg6[%c1, %c0_4, %c0_5] : memref<2x32x32xf32, #tpu.memory_space<vmem>>, vector<1x32x32xf32>
    %4 = vector.shape_cast %3 : vector<1x32x32xf32> to vector<32x32xf32>
    %cst = arith.constant 0.000000e+00 : f32
    %5 = vector.broadcast %cst : f32 to vector<32x128xf32>
    %6 = arith.maximumf %0, %5 : vector<32x128xf32>
    %c1_6 = arith.constant 1 : index
    %c0_7 = arith.constant 0 : index
    %c0_8 = arith.constant 0 : index
    %7 = vector.load %arg2[%c1_6, %c0_7, %c0_8] : memref<3x128x128xf32, #tpu.memory_space<vmem>>, vector<1x128x128xf32>
    %8 = vector.shape_cast %7 : vector<1x128x128xf32> to vector<128x128xf32>
    %cst_9 = arith.constant dense<0.000000e+00> : vector<32x128xf32>
    %9 = tpu.matmul %6, %8, %cst_9 {dimension_numbers = #tpu.dot_dimension_numbers<[1], [0], [0], [1], [0, 0, 1, 1], [], []>} : vector<32x128xf32>, vector<128x128xf32>, vector<32x128xf32> -> vector<32x128xf32>
    %cst_10 = arith.constant dense<0.000000e+00> : vector<32x128xf32>
    %10 = tpu.matmul %2, %6, %cst_10 {dimension_numbers = #tpu.dot_dimension_numbers<[1], [0], [0], [1], [0, 0, 1, 1], [], []>} : vector<32x32xf32>, vector<32x128xf32>, vector<32x128xf32> -> vector<32x128xf32>
    %c0_11 = arith.constant 0 : index
    %c0_12 = arith.constant 0 : index
    %c0_13 = arith.constant 0 : index
    %11 = vector.load %arg2[%c0_11, %c0_12, %c0_13] : memref<3x128x128xf32, #tpu.memory_space<vmem>>, vector<1x128x128xf32>
    %12 = vector.shape_cast %11 : vector<1x128x128xf32> to vector<128x128xf32>
    %cst_14 = arith.constant dense<0.000000e+00> : vector<32x128xf32>
    %13 = tpu.matmul %10, %12, %cst_14 {dimension_numbers = #tpu.dot_dimension_numbers<[1], [0], [0], [1], [0, 0, 1, 1], [], []>} : vector<32x128xf32>, vector<128x128xf32>, vector<32x128xf32> -> vector<32x128xf32>
    %14 = arith.addf %9, %13 : vector<32x128xf32>
    %cst_15 = arith.constant dense<0.000000e+00> : vector<32x128xf32>
    %15 = tpu.matmul %4, %6, %cst_15 {dimension_numbers = #tpu.dot_dimension_numbers<[1], [0], [0], [1], [0, 0, 1, 1], [], []>} : vector<32x32xf32>, vector<32x128xf32>, vector<32x128xf32> -> vector<32x128xf32>
    %c2 = arith.constant 2 : index
    %c0_16 = arith.constant 0 : index
    %c0_17 = arith.constant 0 : index
    %16 = vector.load %arg2[%c2, %c0_16, %c0_17] : memref<3x128x128xf32, #tpu.memory_space<vmem>>, vector<1x128x128xf32>
    %17 = vector.shape_cast %16 : vector<1x128x128xf32> to vector<128x128xf32>
    %cst_18 = arith.constant dense<0.000000e+00> : vector<32x128xf32>
    %18 = tpu.matmul %15, %17, %cst_18 {dimension_numbers = #tpu.dot_dimension_numbers<[1], [0], [0], [1], [0, 0, 1, 1], [], []>} : vector<32x128xf32>, vector<128x128xf32>, vector<32x128xf32> -> vector<32x128xf32>
    %19 = arith.addf %14, %18 : vector<32x128xf32>
    %c0_19 = arith.constant 0 : index
    %c0_20 = arith.constant 0 : index
    %20 = vector.load %arg3[%c0_19, %c0_20] : memref<1x128xf32, #tpu.memory_space<vmem>>, vector<1x128xf32>
    %21 = vector.broadcast %20 : vector<1x128xf32> to vector<32x128xf32>
    %22 = arith.addf %19, %21 : vector<32x128xf32>
    %cst_21 = arith.constant 0.000000e+00 : f32
    %23 = vector.broadcast %cst_21 : f32 to vector<32x128xf32>
    %24 = arith.maximumf %22, %23 : vector<32x128xf32>
    %c1_22 = arith.constant 1 : index
    %c0_23 = arith.constant 0 : index
    %c0_24 = arith.constant 0 : index
    %25 = vector.load %arg4[%c1_22, %c0_23, %c0_24] : memref<3x128x128xf32, #tpu.memory_space<vmem>>, vector<1x128x128xf32>
    %26 = vector.shape_cast %25 : vector<1x128x128xf32> to vector<128x128xf32>
    %cst_25 = arith.constant dense<0.000000e+00> : vector<32x128xf32>
    %27 = tpu.matmul %24, %26, %cst_25 {dimension_numbers = #tpu.dot_dimension_numbers<[1], [0], [0], [1], [0, 0, 1, 1], [], []>} : vector<32x128xf32>, vector<128x128xf32>, vector<32x128xf32> -> vector<32x128xf32>
    %cst_26 = arith.constant dense<0.000000e+00> : vector<32x128xf32>
    %28 = tpu.matmul %2, %24, %cst_26 {dimension_numbers = #tpu.dot_dimension_numbers<[1], [0], [0], [1], [0, 0, 1, 1], [], []>} : vector<32x32xf32>, vector<32x128xf32>, vector<32x128xf32> -> vector<32x128xf32>
    %c0_27 = arith.constant 0 : index
    %c0_28 = arith.constant 0 : index
    %c0_29 = arith.constant 0 : index
    %29 = vector.load %arg4[%c0_27, %c0_28, %c0_29] : memref<3x128x128xf32, #tpu.memory_space<vmem>>, vector<1x128x128xf32>
    %30 = vector.shape_cast %29 : vector<1x128x128xf32> to vector<128x128xf32>
    %cst_30 = arith.constant dense<0.000000e+00> : vector<32x128xf32>
    %31 = tpu.matmul %28, %30, %cst_30 {dimension_numbers = #tpu.dot_dimension_numbers<[1], [0], [0], [1], [0, 0, 1, 1], [], []>} : vector<32x128xf32>, vector<128x128xf32>, vector<32x128xf32> -> vector<32x128xf32>
    %32 = arith.addf %27, %31 : vector<32x128xf32>
    %cst_31 = arith.constant dense<0.000000e+00> : vector<32x128xf32>
    %33 = tpu.matmul %4, %24, %cst_31 {dimension_numbers = #tpu.dot_dimension_numbers<[1], [0], [0], [1], [0, 0, 1, 1], [], []>} : vector<32x32xf32>, vector<32x128xf32>, vector<32x128xf32> -> vector<32x128xf32>
    %c2_32 = arith.constant 2 : index
    %c0_33 = arith.constant 0 : index
    %c0_34 = arith.constant 0 : index
    %34 = vector.load %arg4[%c2_32, %c0_33, %c0_34] : memref<3x128x128xf32, #tpu.memory_space<vmem>>, vector<1x128x128xf32>
    %35 = vector.shape_cast %34 : vector<1x128x128xf32> to vector<128x128xf32>
    %cst_35 = arith.constant dense<0.000000e+00> : vector<32x128xf32>
    %36 = tpu.matmul %33, %35, %cst_35 {dimension_numbers = #tpu.dot_dimension_numbers<[1], [0], [0], [1], [0, 0, 1, 1], [], []>} : vector<32x128xf32>, vector<128x128xf32>, vector<32x128xf32> -> vector<32x128xf32>
    %37 = arith.addf %32, %36 : vector<32x128xf32>
    %c0_36 = arith.constant 0 : index
    %c0_37 = arith.constant 0 : index
    %38 = vector.load %arg5[%c0_36, %c0_37] : memref<1x128xf32, #tpu.memory_space<vmem>>, vector<1x128xf32>
    %39 = vector.broadcast %38 : vector<1x128xf32> to vector<32x128xf32>
    %40 = arith.addf %37, %39 : vector<32x128xf32>
    %41 = tpu.iota {dimensions = array<i32: 0>} : vector<32x1xi32>
    %c16_i32 = arith.constant 16 : i32
    %c0_i32 = arith.constant 0 : i32
    %42 = arith.cmpi eq, %c16_i32, %c0_i32 : i32
    %c1_i32 = arith.constant 1 : i32
    %43 = arith.select %42, %c1_i32, %c16_i32 : i32
    %44 = vector.broadcast %43 : i32 to vector<32x1xi32>
    %45 = arith.remsi %41, %44 : vector<32x1xi32>
    %c0_i32_38 = arith.constant 0 : i32
    %46 = vector.broadcast %c0_i32_38 : i32 to vector<32x1xi32>
    %47 = arith.cmpi ne, %45, %46 : vector<32x1xi32>
    %c0_i32_39 = arith.constant 0 : i32
    %48 = vector.broadcast %c0_i32_39 : i32 to vector<32x1xi32>
    %49 = arith.cmpi slt, %45, %48 : vector<32x1xi32>
    %c0_i32_40 = arith.constant 0 : i32
    %50 = arith.cmpi slt, %43, %c0_i32_40 : i32
    %51 = vector.broadcast %50 : i1 to vector<32x1xi1>
    %52 = vector.broadcast %51 : vector<32x1xi1> to vector<32x1xi1>
    %53 = arith.xori %49, %52 : vector<32x1xi1>
    %54 = arith.andi %53, %47 : vector<32x1xi1>
    %55 = vector.broadcast %43 : i32 to vector<32x1xi32>
    %56 = arith.addi %45, %55 : vector<32x1xi32>
    %57 = arith.select %54, %56, %45 : vector<32x1xi1>, vector<32x1xi32>
    %c0_i32_41 = arith.constant 0 : i32
    %58 = vector.broadcast %c0_i32_41 : i32 to vector<32x1xi32>
    %59 = arith.cmpi eq, %57, %58 : vector<32x1xi32>
    %c15_i32 = arith.constant 15 : i32
    %60 = vector.broadcast %c15_i32 : i32 to vector<32x1xi32>
    %61 = arith.cmpi eq, %57, %60 : vector<32x1xi32>
    %62 = tpu.iota {dimensions = array<i32: 1>} : vector<1x128xi32>
    %c8_i32 = arith.constant 8 : i32
    %63 = vector.broadcast %c8_i32 : i32 to vector<1x128xi32>
    %64 = arith.cmpi slt, %62, %63 : vector<1x128xi32>
    %c120_i32 = arith.constant 120 : i32
    %65 = vector.broadcast %c120_i32 : i32 to vector<1x128xi32>
    %66 = arith.cmpi sge, %62, %65 : vector<1x128xi32>
    %c0_42 = arith.constant 0 : index
    %c0_43 = arith.constant 0 : index
    %c0_44 = arith.constant 0 : index
    %67 = vector.load %arg7[%c0_42, %c0_43, %c0_44] : memref<2x128x128xf32, #tpu.memory_space<vmem>>, vector<1x128x128xf32>
    %68 = vector.shape_cast %67 : vector<1x128x128xf32> to vector<128x128xf32>
    %cst_45 = arith.constant dense<0.000000e+00> : vector<32x128xf32>
    %69 = tpu.matmul %40, %68, %cst_45 {dimension_numbers = #tpu.dot_dimension_numbers<[1], [0], [0], [1], [0, 0, 1, 1], [], []>} : vector<32x128xf32>, vector<128x128xf32>, vector<32x128xf32> -> vector<32x128xf32>
    %cst_46 = arith.constant -1.000000e+30 : f32
    %70 = vector.shape_cast %64 : vector<1x128xi1> to vector<1x128xi1>
    %71 = vector.broadcast %70 : vector<1x128xi1> to vector<32x128xi1>
    %72 = vector.broadcast %cst_46 : f32 to vector<32x128xf32>
    %73 = arith.select %71, %72, %69 : vector<32x128xi1>, vector<32x128xf32>
    %c1_47 = arith.constant 1 : index
    %c0_48 = arith.constant 0 : index
    %c0_49 = arith.constant 0 : index
    %74 = vector.load %arg7[%c1_47, %c0_48, %c0_49] : memref<2x128x128xf32, #tpu.memory_space<vmem>>, vector<1x128x128xf32>
    %75 = vector.shape_cast %74 : vector<1x128x128xf32> to vector<128x128xf32>
    %cst_50 = arith.constant dense<0.000000e+00> : vector<32x128xf32>
    %76 = tpu.matmul %40, %75, %cst_50 {dimension_numbers = #tpu.dot_dimension_numbers<[1], [0], [0], [1], [0, 0, 1, 1], [], []>} : vector<32x128xf32>, vector<128x128xf32>, vector<32x128xf32> -> vector<32x128xf32>
    %cst_51 = arith.constant -1.000000e+30 : f32
    %77 = vector.shape_cast %66 : vector<1x128xi1> to vector<1x128xi1>
    %78 = vector.broadcast %77 : vector<1x128xi1> to vector<32x128xi1>
    %79 = vector.broadcast %cst_51 : f32 to vector<32x128xf32>
    %80 = arith.select %78, %79, %76 : vector<32x128xi1>, vector<32x128xf32>
    %81 = arith.maximumf %40, %73 : vector<32x128xf32>
    %82 = arith.maximumf %81, %80 : vector<32x128xf32>
    %cst_52 = arith.constant dense<0.000000e+00> : vector<32x128xf32>
    %83 = tpu.matmul %2, %82, %cst_52 {dimension_numbers = #tpu.dot_dimension_numbers<[1], [0], [0], [1], [0, 0, 1, 1], [], []>} : vector<32x32xf32>, vector<32x128xf32>, vector<32x128xf32> -> vector<32x128xf32>
    %cst_53 = arith.constant -1.000000e+30 : f32
    %84 = vector.shape_cast %59 : vector<32x1xi1> to vector<32x1xi1>
    %85 = vector.broadcast %84 : vector<32x1xi1> to vector<32x128xi1>
    %86 = vector.broadcast %cst_53 : f32 to vector<32x128xf32>
    %87 = arith.select %85, %86, %83 : vector<32x128xi1>, vector<32x128xf32>
    %cst_54 = arith.constant dense<0.000000e+00> : vector<32x128xf32>
    %88 = tpu.matmul %4, %82, %cst_54 {dimension_numbers = #tpu.dot_dimension_numbers<[1], [0], [0], [1], [0, 0, 1, 1], [], []>} : vector<32x32xf32>, vector<32x128xf32>, vector<32x128xf32> -> vector<32x128xf32>
    %cst_55 = arith.constant -1.000000e+30 : f32
    %89 = vector.shape_cast %61 : vector<32x1xi1> to vector<32x1xi1>
    %90 = vector.broadcast %89 : vector<32x1xi1> to vector<32x128xi1>
    %91 = vector.broadcast %cst_55 : f32 to vector<32x128xf32>
    %92 = arith.select %90, %91, %88 : vector<32x128xi1>, vector<32x128xf32>
    %93 = arith.maximumf %82, %87 : vector<32x128xf32>
    %94 = arith.maximumf %93, %92 : vector<32x128xf32>
    %c0_56 = arith.constant 0 : index
    %c0_57 = arith.constant 0 : index
    %95 = vector.load %arg8[%c0_56, %c0_57] : memref<128x128xf32, #tpu.memory_space<vmem>>, vector<128x128xf32>
    %cst_58 = arith.constant dense<0.000000e+00> : vector<32x128xf32>
    %96 = tpu.matmul %0, %95, %cst_58 {dimension_numbers = #tpu.dot_dimension_numbers<[1], [0], [0], [1], [0, 0, 1, 1], [], []>} : vector<32x128xf32>, vector<128x128xf32>, vector<32x128xf32> -> vector<32x128xf32>
    %97 = arith.addf %94, %96 : vector<32x128xf32>
    %c0_59 = arith.constant 0 : index
    %c0_60 = arith.constant 0 : index
    %98 = vector.load %arg10[%c0_59, %c0_60] : memref<16x32xf32, #tpu.memory_space<vmem>>, vector<16x32xf32>
    %cst_61 = arith.constant dense<0.000000e+00> : vector<16x128xf32>
    %99 = tpu.matmul %98, %97, %cst_61 {dimension_numbers = #tpu.dot_dimension_numbers<[1], [0], [0], [1], [0, 0, 1, 1], [], []>} : vector<16x32xf32>, vector<32x128xf32>, vector<16x128xf32> -> vector<16x128xf32>
    %c0_62 = arith.constant 0 : index
    %c0_63 = arith.constant 0 : index
    %100 = vector.load %arg9[%c0_62, %c0_63] : memref<1x128xf32, #tpu.memory_space<vmem>>, vector<1x128xf32>
    %101 = vector.broadcast %100 : vector<1x128xf32> to vector<16x128xf32>
    %102 = arith.addf %99, %101 : vector<16x128xf32>
    %c0_64 = arith.constant 0 : index
    %c0_65 = arith.constant 0 : index
    %103 = vector.load %arg11[%c0_64, %c0_65] : memref<16x128xf32, #tpu.memory_space<vmem>>, vector<16x128xf32>
    tpu.vector_store %arg11[%c0_64, %c0_65], %102 {strides = array<i32>} : memref<16x128xf32, #tpu.memory_space<vmem>>, vector<16x128xf32>,
    return
  }
  func.func @transform_0(%arg0: i32) -> (i32, i32) {
    %c0_i32 = arith.constant 0 : i32
    %c0_i32_0 = arith.constant 0 : i32
    return %arg0, %c0_i32 : i32, i32
  }
  func.func @transform_1(%arg0: i32) -> (i32, i32, i32) {
    %c0_i32 = arith.constant 0 : i32
    %c0_i32_0 = arith.constant 0 : i32
    %c0_i32_1 = arith.constant 0 : i32
    %c0_i32_2 = arith.constant 0 : i32
    return %c0_i32, %c0_i32_0, %c0_i32_1 : i32, i32, i32
  }
  func.func @transform_2(%arg0: i32) -> (i32, i32) {
    %c0_i32 = arith.constant 0 : i32
    %c0_i32_0 = arith.constant 0 : i32
    %c0_i32_1 = arith.constant 0 : i32
    return %c0_i32, %c0_i32_0 : i32, i32
  }
  func.func @transform_3(%arg0: i32) -> (i32, i32, i32) {
    %c0_i32 = arith.constant 0 : i32
    %c0_i32_0 = arith.constant 0 : i32
    %c0_i32_1 = arith.constant 0 : i32
    %c0_i32_2 = arith.constant 0 : i32
    return %c0_i32, %c0_i32_0, %c0_i32_1 : i32, i32, i32
  }
  func.func @transform_4(%arg0: i32) -> (i32, i32) {
    %c0_i32 = arith.constant 0 : i32
    %c0_i32_0 = arith.constant 0 : i32
    %c0_i32_1 = arith.constant 0 : i32
    return %c0_i32, %c0_i32_0 : i32, i32
  }
  func.func @transform_5(%arg0: i32) -> (i32, i32, i32) {
    %c0_i32 = arith.constant 0 : i32
    %c0_i32_0 = arith.constant 0 : i32
    %c0_i32_1 = arith.constant 0 : i32
    %c0_i32_2 = arith.constant 0 : i32
    return %c0_i32, %c0_i32_0, %c0_i32_1 : i32, i32, i32
  }
  func.func @transform_6(%arg0: i32) -> (i32, i32, i32) {
    %c0_i32 = arith.constant 0 : i32
    %c0_i32_0 = arith.constant 0 : i32
    %c0_i32_1 = arith.constant 0 : i32
    %c0_i32_2 = arith.constant 0 : i32
    return %c0_i32, %c0_i32_0, %c0_i32_1 : i32, i32, i32
  }
  func.func @transform_7(%arg0: i32) -> (i32, i32) {
    %c0_i32 = arith.constant 0 : i32
    %c0_i32_0 = arith.constant 0 : i32
    %c0_i32_1 = arith.constant 0 : i32
    return %c0_i32, %c0_i32_0 : i32, i32
  }
  func.func @transform_8(%arg0: i32) -> (i32, i32) {
    %c0_i32 = arith.constant 0 : i32
    %c0_i32_0 = arith.constant 0 : i32
    %c0_i32_1 = arith.constant 0 : i32
    return %c0_i32, %c0_i32_0 : i32, i32
  }
  func.func @transform_9(%arg0: i32) -> (i32, i32) {
    %c0_i32 = arith.constant 0 : i32
    %c0_i32_0 = arith.constant 0 : i32
    %c0_i32_1 = arith.constant 0 : i32
    return %c0_i32, %c0_i32_0 : i32, i32
  }
  func.func @transform_10(%arg0: i32) -> (i32, i32) {
    %c0_i32 = arith.constant 0 : i32
    %c0_i32_0 = arith.constant 0 : i32
    return %arg0, %c0_i32 : i32, i32
  }
}

</mosaic_0001>

<llo_original>
// kernel: block_forward.1
$region0: #{block_forward.1}
  #allocation0 [shape = 'u32[]', space=smem, size = 0x4, offset = 0x4, fixed_abs, tag = 'smem constant byte address 0x4 - core index']
  #allocation1 [shape = 'u32[144,128]{1,0:T(1,128)}', space=vmem, size = 0x12000, scoped, tag = 'internal scratch']
  %s0 = inlined_call_operand.vmem [shape: f32[32,128], index: 0, kind: input, shape index: {}]
  %s1 = inlined_call_operand.vmem [shape: f32[3,128,128], index: 1, kind: input, shape index: {}]
  %s2 = inlined_call_operand.vmem [shape: f32[1,128], index: 2, kind: input, shape index: {}]
  %s3 = inlined_call_operand.vmem [shape: f32[3,128,128], index: 3, kind: input, shape index: {}]
  %s4 = inlined_call_operand.vmem [shape: f32[1,128], index: 4, kind: input, shape index: {}]
  %s5 = inlined_call_operand.hbm [shape: f32[2,32,32], index: 5, kind: input, shape index: {}]
  %s6 = inlined_call_operand.vmem [shape: f32[2,128,128], index: 6, kind: input, shape index: {}]
  %s7 = inlined_call_operand.vmem [shape: f32[128,128], index: 7, kind: input, shape index: {}]
  %s8 = inlined_call_operand.vmem [shape: f32[1,128], index: 8, kind: input, shape index: {}]
  %s9 = inlined_call_operand.vmem [shape: f32[16,32], index: 9, kind: input, shape index: {}]
  %s10 = inlined_call_operand.vmem [shape: f32[16,128], index: 10, kind: output, shape index: {}]
  %s11 = sld [smem:[#allocation0]]
  $region54: #{block_forward.1} parent=0
    _
  %s13 = ssub.s32 1, %s11
  %s14 = scalar_select 0, %s13, %s11
  $region1: #{block_forward.1} parent=0
    #allocation2 [shape = 'u8[32768]{0}', space=vmem, size = 0x8000, scoped, tag = 'input window, operand 5, single buffered']
    #allocation3 [shape = 's32[1]{0}', space=sflag, size = 0x4, scoped, tag = 'scoped memory for block_forward.1']
    %15 = vsyncpa [#allocation3], 0
    // Predicated region
    $region2: #{block_forward.1} parent=1 // pred_check
      _
    $region3: #{block_forward.1} parent=1 // pred_check_branch
      %17 = sbr.rel (0) target = $region5
    $region4: #{block_forward.1} parent=1 // pred_region
      _
    $region5: #{block_forward.1} parent=1 // pred_fallthru
      _
    // Predicated region
    $region6: #{block_forward.1} parent=1 // pred_check
      _
    $region7: #{block_forward.1} parent=1 // pred_check_branch
      %19 = sbr.rel (0) target = $region9
    $region8: #{block_forward.1} parent=1 // pred_region
      _
    $region9: #{block_forward.1} parent=1 // pred_fallthru
      _
    // Predicated region
    $region10: #{block_forward.1} parent=1 // pred_check
      _
    $region11: #{block_forward.1} parent=1 // pred_check_branch
      %21 = sbr.rel (0) target = $region13
    $region12: #{block_forward.1} parent=1 // pred_region
      _
    $region13: #{block_forward.1} parent=1 // pred_fallthru
      _
    // Predicated region
    $region14: #{block_forward.1} parent=1 // pred_check
      _
    $region15: #{block_forward.1} parent=1 // pred_check_branch
      %23 = sbr.rel (0) target = $region17
    $region16: #{block_forward.1} parent=1 // pred_region
      _
    $region17: #{block_forward.1} parent=1 // pred_fallthru
      _
    // Predicated region
    $region18: #{block_forward.1} parent=1 // pred_check
      _
    $region19: #{block_forward.1} parent=1 // pred_check_branch
      %25 = sbr.rel (0) target = $region21
    $region20: #{block_forward.1} parent=1 // pred_region
      _
    $region21: #{block_forward.1} parent=1 // pred_fallthru
      _
    // Predicated region
    $region22: #{block_forward.1} parent=1 // pred_check
      _
    $region23: #{block_forward.1} parent=1 // pred_check_branch
      %27 = sbr.rel (0) target = $region25
    $region24: #{block_forward.1} parent=1 // pred_region
      %s29 = ssub.s32 1024, 1024
      %30 = vsyncadd [#allocation3], %s29
      %s31 = sshll.u32 [#allocation2], 4
      %s32 = int_to_ptr.vmem [resolvable:$true] %s31
      %37 = dma.hbm_to_vmem [thread:$0]  %s5, 1024, %s32, [#allocation3], 128, 128, 8
    $region25: #{block_forward.1} parent=1 // pred_fallthru
      _
    // Predicated region
    $region26: #{block_forward.1} parent=1 // pred_check
      _
    $region27: #{block_forward.1} parent=1 // pred_check_branch
      %39 = sbr.rel (0) target = $region29
    $region28: #{block_forward.1} parent=1 // pred_region
      _
    $region29: #{block_forward.1} parent=1 // pred_fallthru
      _
    // Predicated region
    $region30: #{block_forward.1} parent=1 // pred_check
      _
    $region31: #{block_forward.1} parent=1 // pred_check_branch
      %41 = sbr.rel (0) target = $region33
    $region32: #{block_forward.1} parent=1 // pred_region
      _
    $region33: #{block_forward.1} parent=1 // pred_fallthru
      _
    // Predicated region
    $region34: #{block_forward.1} parent=1 // pred_check
      _
    $region35: #{block_forward.1} parent=1 // pred_check_branch
      %43 = sbr.rel (0) target = $region37
    $region36: #{block_forward.1} parent=1 // pred_region
      _
    $region37: #{block_forward.1} parent=1 // pred_fallthru
      _
    // Predicated region
    $region38: #{block_forward.1} parent=1 // pred_check
      _
    $region39: #{block_forward.1} parent=1 // pred_check_branch
      %45 = sbr.rel (0) target = $region41
    $region40: #{block_forward.1} parent=1 // pred_region
      _
    $region41: #{block_forward.1} parent=1 // pred_fallthru
      _
    // Predicated region
    $region42: #{block_forward.1} parent=1 // pred_check
      _
    $region43: #{block_forward.1} parent=1 // pred_check_branch
      %47 = sbr.rel (0) target = $region45
    $region44: #{block_forward.1} parent=1 // pred_region
      %48 = dma.done [#allocation3], 1024
    $region45: #{block_forward.1} parent=1 // pred_fallthru
      _
    %v49 = vld [vmem:[%s0] sm:$0xff]
    %v50 = vld [vmem:[%s0 + $0x8] sm:$0xff]
    %v51 = vld [vmem:[%s0 + $0x10] sm:$0xff]
    %v52 = vld [vmem:[%s0 + $0x18] sm:$0xff]
    %v53 = vld [vmem:[#allocation2] sm:$0xff]
    %v54 = vld [vmem:[#allocation2 + $0x8] sm:$0xff]
    %v55 = vld [vmem:[#allocation2 + $0x10] sm:$0xff]
    %v56 = vld [vmem:[#allocation2 + $0x18] sm:$0xff]
    %s57 = scalar_lea.vmem [#allocation2], 32
    %v58 = vld [vmem:[%s57] sm:$0xff]
    %v59 = vld [vmem:[%s57 + $0x8] sm:$0xff]
    %v60 = vld [vmem:[%s57 + $0x10] sm:$0xff]
    %v61 = vld [vmem:[%s57 + $0x18] sm:$0xff]
    %v62 = vmax.f32 %v49, 0.0
    %v63 = vmax.f32 %v50, 0.0
    %v64 = vmax.f32 %v51, 0.0
    %v65 = vmax.f32 %v52, 0.0
    %s66 = scalar_lea.vmem %s1, 128
    %v67 = vld [vmem:[%s66] sm:$0xff]
    %v68 = vld [vmem:[%s66 + $0x8] sm:$0xff]
    %v69 = vld [vmem:[%s66 + $0x10] sm:$0xff]
    %v70 = vld [vmem:[%s66 + $0x18] sm:$0xff]
    %v71 = vld [vmem:[%s66 + $0x20] sm:$0xff]
    %v72 = vld [vmem:[%s66 + $0x28] sm:$0xff]
    %v73 = vld [vmem:[%s66 + $0x30] sm:$0xff]
    %v74 = vld [vmem:[%s66 + $0x38] sm:$0xff]
    %v75 = vld [vmem:[%s66 + $0x40] sm:$0xff]
    %v76 = vld [vmem:[%s66 + $0x48] sm:$0xff]
    %v77 = vld [vmem:[%s66 + $0x50] sm:$0xff]
    %v78 = vld [vmem:[%s66 + $0x58] sm:$0xff]
    %v79 = vld [vmem:[%s66 + $0x60] sm:$0xff]
    %v80 = vld [vmem:[%s66 + $0x68] sm:$0xff]
    %v81 = vld [vmem:[%s66 + $0x70] sm:$0xff]
    %v82 = vld [vmem:[%s66 + $0x78] sm:$0xff]
    %vm83 = vcmask 261120
    %v85 = vsel %vm83, %v53, 0
    %v88 = vsel %vm83, %v54, 0
    %v91 = vsel %vm83, %v55, 0
    %v94 = vsel %vm83, %v56, 0
    %96 = vmatprep.subr.mxu0 0.0
    %97 = vmatpush1.msra.mxu0 0.0
    %98 = vmatprep.subr.mxu0 0.0
    %99 = vmatpush1.msra.mxu0 0.0
    %100 = vmatprep.subr.mxu0 0.0
    %101 = vmatpush1.msra.mxu0 0.0
    %102 = vmatprep.subr.mxu0 0.0
    %103 = vmatpush1.msra.mxu0 0.0
    %104 = vmatprep.subr.mxu0 0.0
    %105 = vmatpush1.msra.mxu0 0.0
    %106 = vmatprep.subr.mxu0 0.0
    %107 = vmatpush1.msra.mxu0 0.0
    %108 = vmatprep.subr.mxu0 0.0
    %109 = vmatpush1.msra.mxu0 0.0
    %110 = vmatprep.subr.mxu0 0.0
    %111 = vmatpush1.msra.mxu0 0.0
    %112 = vmatprep.subr.mxu0 0.0
    %113 = vmatpush1.msra.mxu0 0.0
    %114 = vmatprep.subr.mxu0 0.0
    %115 = vmatpush1.msra.mxu0 0.0
    %116 = vmatprep.subr.mxu0 0.0
    %117 = vmatpush1.msra.mxu0 0.0
    %118 = vmatprep.subr.mxu0 0.0
    %119 = vmatpush1.msra.mxu0 0.0
    %120 = vmatprep.subr.mxu0 0.0
    %121 = vmatpush1.msra.mxu0 %v65
    %122 = vmatprep.subr.mxu0 0.0
    %123 = vmatpush1.msra.mxu0 %v64
    %124 = vmatprep.subr.mxu0 0.0
    %125 = vmatpush1.msra.mxu0 %v63
    %126 = vmatprep.subr.mxu0 0.0
    %127 = vmatpush1.msra.mxu0 %v62
    %128 = vmatprep.subr.mxu0 0.0
    %129 = vmatpush2.msra.mxu0 0.0
    %130 = vmatprep.subr.mxu0 0.0
    %131 = vmatpush2.msra.mxu0 0.0
    %132 = vmatprep.subr.mxu0 0.0
    %133 = vmatpush2.msra.mxu0 0.0
    %134 = vmatprep.subr.mxu0 0.0
    %135 = vmatpush2.msra.mxu0 0.0
    %136 = vmatprep.subr.mxu0 0.0
    %137 = vmatpush2.msra.mxu0 0.0
    %138 = vmatprep.subr.mxu0 0.0
    %139 = vmatpush2.msra.mxu0 0.0
    %140 = vmatprep.subr.mxu0 0.0
    %141 = vmatpush2.msra.mxu0 0.0
    %142 = vmatprep.subr.mxu0 0.0
    %143 = vmatpush2.msra.mxu0 0.0
    %144 = vmatprep.subr.mxu0 0.0
    %145 = vmatpush2.msra.mxu0 0.0
    %146 = vmatprep.subr.mxu0 0.0
    %147 = vmatpush2.msra.mxu0 0.0
    %148 = vmatprep.subr.mxu0 0.0
    %149 = vmatpush2.msra.mxu0 0.0
    %150 = vmatprep.subr.mxu0 0.0
    %151 = vmatpush2.msra.mxu0 0.0
    %152 = vmatprep.subr.mxu0 0.0
    %153 = vmatpush2.msra.mxu0 0.0
    %154 = vmatprep.subr.mxu0 0.0
    %155 = vmatpush2.msra.mxu0 0.0
    %156 = vmatprep.subr.mxu0 0.0
    %157 = vmatpush2.msra.mxu0 0.0
    %158 = vmatprep.subr.mxu0 0.0
    %159 = vmatpush2.msra.mxu0 0.0
    %160 = vmatprep.mubr.f32.mxu0 0.0
    %161 = vmatmul.mubr.f32.gmra.mxu0 %v85
    %v162 = vpop.f32.mrf.mxu0
    %v163 = vadd.f32 0.0, %v162
    %v164 = vpop.f32.mrf.mxu0
    %165 = vmatprep.mubr.f32.mxu0 0.0
    %166 = vmatmul.mubr.f32.gmra.mxu0 %v88
    %v167 = vpop.f32.mrf.mxu0
    %v168 = vadd.f32 0.0, %v167
    %v169 = vpop.f32.mrf.mxu0
    %170 = vmatprep.mubr.f32.mxu0 0.0
    %171 = vmatmul.mubr.f32.gmra.mxu0 %v91
    %v172 = vpop.f32.mrf.mxu0
    %v173 = vadd.f32 0.0, %v172
    %v174 = vpop.f32.mrf.mxu0
    %175 = vmatprep.mubr.f32.mxu0 0.0
    %176 = vmatmul.mubr.f32.gmra.mxu0 %v94
    %v177 = vpop.f32.mrf.mxu0
    %v178 = vadd.f32 0.0, %v177
    %v179 = vpop.f32.mrf.mxu0
    %180 = vdwg.mxu0
    %v181 = vld [vmem:[%s1] sm:$0xff]
    %v182 = vld [vmem:[%s1 + $0x8] sm:$0xff]
    %v183 = vld [vmem:[%s1 + $0x10] sm:$0xff]
    %v184 = vld [vmem:[%s1 + $0x18] sm:$0xff]
    %v185 = vld [vmem:[%s1 + $0x20] sm:$0xff]
    %v186 = vld [vmem:[%s1 + $0x28] sm:$0xff]
    %v187 = vld [vmem:[%s1 + $0x30] sm:$0xff]
    %v188 = vld [vmem:[%s1 + $0x38] sm:$0xff]
    %v189 = vld [vmem:[%s1 + $0x40] sm:$0xff]
    %v190 = vld [vmem:[%s1 + $0x48] sm:$0xff]
    %v191 = vld [vmem:[%s1 + $0x50] sm:$0xff]
    %v192 = vld [vmem:[%s1 + $0x58] sm:$0xff]
    %v193 = vld [vmem:[%s1 + $0x60] sm:$0xff]
    %v194 = vld [vmem:[%s1 + $0x68] sm:$0xff]
    %v195 = vld [vmem:[%s1 + $0x70] sm:$0xff]
    %v196 = vld [vmem:[%s1 + $0x78] sm:$0xff]
    %197 = vmatprep.subr.mxu0 0.0
    %198 = vmatpush1.msra.mxu0 %v196
    %199 = vmatprep.subr.mxu0 0.0
    %200 = vmatpush1.msra.mxu0 %v195
    %201 = vmatprep.subr.mxu0 0.0
    %202 = vmatpush1.msra.mxu0 %v194
    %203 = vmatprep.subr.mxu0 0.0
    %204 = vmatpush1.msra.mxu0 %v193
    %205 = vmatprep.subr.mxu0 0.0
    %206 = vmatpush1.msra.mxu0 %v192
    %207 = vmatprep.subr.mxu0 0.0
    %208 = vmatpush1.msra.mxu0 %v191
    %209 = vmatprep.subr.mxu0 0.0
    %210 = vmatpush1.msra.mxu0 %v190
    %211 = vmatprep.subr.mxu0 0.0
    %212 = vmatpush1.msra.mxu0 %v189
    %213 = vmatprep.subr.mxu0 0.0
    %214 = vmatpush1.msra.mxu0 %v188
    %215 = vmatprep.subr.mxu0 0.0
    %216 = vmatpush1.msra.mxu0 %v187
    %217 = vmatprep.subr.mxu0 0.0
    %218 = vmatpush1.msra.mxu0 %v186
    %219 = vmatprep.subr.mxu0 0.0
    %220 = vmatpush1.msra.mxu0 %v185
    %221 = vmatprep.subr.mxu0 0.0
    %222 = vmatpush1.msra.mxu0 %v184
    %223 = vmatprep.subr.mxu0 0.0
    %224 = vmatpush1.msra.mxu0 %v183
    %225 = vmatprep.subr.mxu0 0.0
    %226 = vmatpush1.msra.mxu0 %v182
    %227 = vmatprep.subr.mxu0 0.0
    %228 = vmatpush1.msra.mxu0 %v181
    %229 = vmatprep.subr.mxu0 0.0
    %230 = vmatpush2.msra.mxu0 0.0
    %231 = vmatprep.subr.mxu0 0.0
    %232 = vmatpush2.msra.mxu0 0.0
    %233 = vmatprep.subr.mxu0 0.0
    %234 = vmatpush2.msra.mxu0 0.0
    %235 = vmatprep.subr.mxu0 0.0
    %236 = vmatpush2.msra.mxu0 0.0
    %237 = vmatprep.subr.mxu0 0.0
    %238 = vmatpush2.msra.mxu0 0.0
    %239 = vmatprep.subr.mxu0 0.0
    %240 = vmatpush2.msra.mxu0 0.0
    %241 = vmatprep.subr.mxu0 0.0
    %242 = vmatpush2.msra.mxu0 0.0
    %243 = vmatprep.subr.mxu0 0.0
    %244 = vmatpush2.msra.mxu0 0.0
    %245 = vmatprep.subr.mxu0 0.0
    %246 = vmatpush2.msra.mxu0 0.0
    %247 = vmatprep.subr.mxu0 0.0
    %248 = vmatpush2.msra.mxu0 0.0
    %249 = vmatprep.subr.mxu0 0.0
    %250 = vmatpush2.msra.mxu0 0.0
    %251 = vmatprep.subr.mxu0 0.0
    %252 = vmatpush2.msra.mxu0 0.0
    %253 = vmatprep.subr.mxu0 0.0
    %254 = vmatpush2.msra.mxu0 0.0
    %255 = vmatprep.subr.mxu0 0.0
    %256 = vmatpush2.msra.mxu0 0.0
    %257 = vmatprep.subr.mxu0 0.0
    %258 = vmatpush2.msra.mxu0 0.0
    %259 = vmatprep.subr.mxu0 0.0
    %260 = vmatpush2.msra.mxu0 0.0
    %261 = vmatprep.mubr.f32.mxu0 0.0
    %262 = vmatmul.mubr.f32.gmra.mxu0 %v163
    %v263 = vpop.f32.mrf.mxu0
    %v264 = vadd.f32 0.0, %v263
    %v265 = vpop.f32.mrf.mxu0
    %266 = vmatprep.mubr.f32.mxu0 0.0
    %267 = vmatmul.mubr.f32.gmra.mxu0 %v168
    %v268 = vpop.f32.mrf.mxu0
    %v269 = vadd.f32 0.0, %v268
    %v270 = vpop.f32.mrf.mxu0
    %271 = vmatprep.mubr.f32.mxu0 0.0
    %272 = vmatmul.mubr.f32.gmra.mxu0 %v173
    %v273 = vpop.f32.mrf.mxu0
    %v274 = vadd.f32 0.0, %v273
    %v275 = vpop.f32.mrf.mxu0
    %276 = vmatprep.mubr.f32.mxu0 0.0
    %277 = vmatmul.mubr.f32.gmra.mxu0 %v178
    %v278 = vpop.f32.mrf.mxu0
    %v279 = vadd.f32 0.0, %v278
    %v280 = vpop.f32.mrf.mxu0
    %281 = vdwg.mxu0
    %282 = vmatprep.subr.mxu0 0.0
    %283 = vmatpush1.msra.mxu0 %v82
    %284 = vmatprep.subr.mxu0 0.0
    %285 = vmatpush1.msra.mxu0 %v81
    %286 = vmatprep.subr.mxu0 0.0
    %287 = vmatpush1.msra.mxu0 %v80
    %288 = vmatprep.subr.mxu0 0.0
    %289 = vmatpush1.msra.mxu0 %v79
    %290 = vmatprep.subr.mxu0 0.0
    %291 = vmatpush1.msra.mxu0 %v78
    %292 = vmatprep.subr.mxu0 0.0
    %293 = vmatpush1.msra.mxu0 %v77
    %294 = vmatprep.subr.mxu0 0.0
    %295 = vmatpush1.msra.mxu0 %v76
    %296 = vmatprep.subr.mxu0 0.0
    %297 = vmatpush1.msra.mxu0 %v75
    %298 = vmatprep.subr.mxu0 0.0
    %299 = vmatpush1.msra.mxu0 %v74
    %300 = vmatprep.subr.mxu0 0.0
    %301 = vmatpush1.msra.mxu0 %v73
    %302 = vmatprep.subr.mxu0 0.0
    %303 = vmatpush1.msra.mxu0 %v72
    %304 = vmatprep.subr.mxu0 0.0
    %305 = vmatpush1.msra.mxu0 %v71
    %306 = vmatprep.subr.mxu0 0.0
    %307 = vmatpush1.msra.mxu0 %v70
    %308 = vmatprep.subr.mxu0 0.0
    %309 = vmatpush1.msra.mxu0 %v69
    %310 = vmatprep.subr.mxu0 0.0
    %311 = vmatpush1.msra.mxu0 %v68
    %312 = vmatprep.subr.mxu0 0.0
    %313 = vmatpush1.msra.mxu0 %v67
    %314 = vmatprep.subr.mxu0 0.0
    %315 = vmatpush2.msra.mxu0 0.0
    %316 = vmatprep.subr.mxu0 0.0
    %317 = vmatpush2.msra.mxu0 0.0
    %318 = vmatprep.subr.mxu0 0.0
    %319 = vmatpush2.msra.mxu0 0.0
    %320 = vmatprep.subr.mxu0 0.0
    %321 = vmatpush2.msra.mxu0 0.0
    %322 = vmatprep.subr.mxu0 0.0
    %323 = vmatpush2.msra.mxu0 0.0
    %324 = vmatprep.subr.mxu0 0.0
    %325 = vmatpush2.msra.mxu0 0.0
    %326 = vmatprep.subr.mxu0 0.0
    %327 = vmatpush2.msra.mxu0 0.0
    %328 = vmatprep.subr.mxu0 0.0
    %329 = vmatpush2.msra.mxu0 0.0
    %330 = vmatprep.subr.mxu0 0.0
    %331 = vmatpush2.msra.mxu0 0.0
    %332 = vmatprep.subr.mxu0 0.0
    %333 = vmatpush2.msra.mxu0 0.0
    %334 = vmatprep.subr.mxu0 0.0
    %335 = vmatpush2.msra.mxu0 0.0
    %336 = vmatprep.subr.mxu0 0.0
    %337 = vmatpush2.msra.mxu0 0.0
    %338 = vmatprep.subr.mxu0 0.0
    %339 = vmatpush2.msra.mxu0 0.0
    %340 = vmatprep.subr.mxu0 0.0
    %341 = vmatpush2.msra.mxu0 0.0
    %342 = vmatprep.subr.mxu0 0.0
    %343 = vmatpush2.msra.mxu0 0.0
    %344 = vmatprep.subr.mxu0 0.0
    %345 = vmatpush2.msra.mxu0 0.0
    %346 = vmatprep.mubr.f32.mxu0 0.0
    %347 = vmatmul.mubr.f32.gmra.mxu0 %v62
    %v348 = vpop.f32.mrf.mxu0
    %v349 = vadd.f32 %v264, %v348
    %v350 = vpop.f32.mrf.mxu0
    %351 = vmatprep.mubr.f32.mxu0 0.0
    %352 = vmatmul.mubr.f32.gmra.mxu0 %v63
    %v353 = vpop.f32.mrf.mxu0
    %v354 = vadd.f32 %v269, %v353
    %v355 = vpop.f32.mrf.mxu0
    %356 = vmatprep.mubr.f32.mxu0 0.0
    %357 = vmatmul.mubr.f32.gmra.mxu0 %v64
    %v358 = vpop.f32.mrf.mxu0
    %v359 = vadd.f32 %v274, %v358
    %v360 = vpop.f32.mrf.mxu0
    %361 = vmatprep.mubr.f32.mxu0 0.0
    %362 = vmatmul.mubr.f32.gmra.mxu0 %v65
    %v363 = vpop.f32.mrf.mxu0
    %v364 = vadd.f32 %v279, %v363
    %v365 = vpop.f32.mrf.mxu0
    %366 = vdwg.mxu0
    %v368 = vsel %vm83, %v58, 0
    %v371 = vsel %vm83, %v59, 0
    %v374 = vsel %vm83, %v60, 0
    %v377 = vsel %vm83, %v61, 0
    %379 = vmatprep.subr.mxu0 0.0
    %380 = vmatpush1.msra.mxu0 0.0
    %381 = vmatprep.subr.mxu0 0.0
    %382 = vmatpush1.msra.mxu0 0.0
    %383 = vmatprep.subr.mxu0 0.0
    %384 = vmatpush1.msra.mxu0 0.0
    %385 = vmatprep.subr.mxu0 0.0
    %386 = vmatpush1.msra.mxu0 0.0
    %387 = vmatprep.subr.mxu0 0.0
    %388 = vmatpush1.msra.mxu0 0.0
    %389 = vmatprep.subr.mxu0 0.0
    %390 = vmatpush1.msra.mxu0 0.0
    %391 = vmatprep.subr.mxu0 0.0
    %392 = vmatpush1.msra.mxu0 0.0
    %393 = vmatprep.subr.mxu0 0.0
    %394 = vmatpush1.msra.mxu0 0.0
    %395 = vmatprep.subr.mxu0 0.0
    %396 = vmatpush1.msra.mxu0 0.0
    %397 = vmatprep.subr.mxu0 0.0
    %398 = vmatpush1.msra.mxu0 0.0
    %399 = vmatprep.subr.mxu0 0.0
    %400 = vmatpush1.msra.mxu0 0.0
    %401 = vmatprep.subr.mxu0 0.0
    %402 = vmatpush1.msra.mxu0 0.0
    %403 = vmatprep.subr.mxu0 0.0
    %404 = vmatpush1.msra.mxu0 %v65
    %405 = vmatprep.subr.mxu0 0.0
    %406 = vmatpush1.msra.mxu0 %v64
    %407 = vmatprep.subr.mxu0 0.0
    %408 = vmatpush1.msra.mxu0 %v63
    %409 = vmatprep.subr.mxu0 0.0
    %410 = vmatpush1.msra.mxu0 %v62
    %411 = vmatprep.subr.mxu0 0.0
    %412 = vmatpush2.msra.mxu0 0.0
    %413 = vmatprep.subr.mxu0 0.0
    %414 = vmatpush2.msra.mxu0 0.0
    %415 = vmatprep.subr.mxu0 0.0
    %416 = vmatpush2.msra.mxu0 0.0
    %417 = vmatprep.subr.mxu0 0.0
    %418 = vmatpush2.msra.mxu0 0.0
    %419 = vmatprep.subr.mxu0 0.0
    %420 = vmatpush2.msra.mxu0 0.0
    %421 = vmatprep.subr.mxu0 0.0
    %422 = vmatpush2.msra.mxu0 0.0
    %423 = vmatprep.subr.mxu0 0.0
    %424 = vmatpush2.msra.mxu0 0.0
    %425 = vmatprep.subr.mxu0 0.0
    %426 = vmatpush2.msra.mxu0 0.0
    %427 = vmatprep.subr.mxu0 0.0
    %428 = vmatpush2.msra.mxu0 0.0
    %429 = vmatprep.subr.mxu0 0.0
    %430 = vmatpush2.msra.mxu0 0.0
    %431 = vmatprep.subr.mxu0 0.0
    %432 = vmatpush2.msra.mxu0 0.0
    %433 = vmatprep.subr.mxu0 0.0
    %434 = vmatpush2.msra.mxu0 0.0
    %435 = vmatprep.subr.mxu0 0.0
    %436 = vmatpush2.msra.mxu0 0.0
    %437 = vmatprep.subr.mxu0 0.0
    %438 = vmatpush2.msra.mxu0 0.0
    %439 = vmatprep.subr.mxu0 0.0
    %440 = vmatpush2.msra.mxu0 0.0
    %441 = vmatprep.subr.mxu0 0.0
    %442 = vmatpush2.msra.mxu0 0.0
    %443 = vmatprep.mubr.f32.mxu0 0.0
    %444 = vmatmul.mubr.f32.gmra.mxu0 %v368
    %v445 = vpop.f32.mrf.mxu0
    %v446 = vadd.f32 0.0, %v445
    %v447 = vpop.f32.mrf.mxu0
    %448 = vmatprep.mubr.f32.mxu0 0.0
    %449 = vmatmul.mubr.f32.gmra.mxu0 %v371
    %v450 = vpop.f32.mrf.mxu0
    %v451 = vadd.f32 0.0, %v450
    %v452 = vpop.f32.mrf.mxu0
    %453 = vmatprep.mubr.f32.mxu0 0.0
    %454 = vmatmul.mubr.f32.gmra.mxu0 %v374
    %v455 = vpop.f32.mrf.mxu0
    %v456 = vadd.f32 0.0, %v455
    %v457 = vpop.f32.mrf.mxu0
    %458 = vmatprep.mubr.f32.mxu0 0.0
    %459 = vmatmul.mubr.f32.gmra.mxu0 %v377
    %v460 = vpop.f32.mrf.mxu0
    %v461 = vadd.f32 0.0, %v460
    %v462 = vpop.f32.mrf.mxu0
    %463 = vdwg.mxu0
    %s464 = scalar_lea.vmem %s1, 256
    %v465 = vld [vmem:[%s464] sm:$0xff]
    %v466 = vld [vmem:[%s464 + $0x8] sm:$0xff]
    %v467 = vld [vmem:[%s464 + $0x10] sm:$0xff]
    %v468 = vld [vmem:[%s464 + $0x18] sm:$0xff]
    %v469 = vld [vmem:[%s464 + $0x20] sm:$0xff]
    %v470 = vld [vmem:[%s464 + $0x28] sm:$0xff]
    %v471 = vld [vmem:[%s464 + $0x30] sm:$0xff]
    %v472 = vld [vmem:[%s464 + $0x38] sm:$0xff]
    %v473 = vld [vmem:[%s464 + $0x40] sm:$0xff]
    %v474 = vld [vmem:[%s464 + $0x48] sm:$0xff]
    %v475 = vld [vmem:[%s464 + $0x50] sm:$0xff]
    %v476 = vld [vmem:[%s464 + $0x58] sm:$0xff]
    %v477 = vld [vmem:[%s464 + $0x60] sm:$0xff]
    %v478 = vld [vmem:[%s464 + $0x68] sm:$0xff]
    %v479 = vld [vmem:[%s464 + $0x70] sm:$0xff]
    %v480 = vld [vmem:[%s464 + $0x78] sm:$0xff]
    %481 = vmatprep.subr.mxu0 0.0
    %482 = vmatpush1.msra.mxu0 %v480
    %483 = vmatprep.subr.mxu0 0.0
    %484 = vmatpush1.msra.mxu0 %v479
    %485 = vmatprep.subr.mxu0 0.0
    %486 = vmatpush1.msra.mxu0 %v478
    %487 = vmatprep.subr.mxu0 0.0
    %488 = vmatpush1.msra.mxu0 %v477
    %489 = vmatprep.subr.mxu0 0.0
    %490 = vmatpush1.msra.mxu0 %v476
    %491 = vmatprep.subr.mxu0 0.0
    %492 = vmatpush1.msra.mxu0 %v475
    %493 = vmatprep.subr.mxu0 0.0
    %494 = vmatpush1.msra.mxu0 %v474
    %495 = vmatprep.subr.mxu0 0.0
    %496 = vmatpush1.msra.mxu0 %v473
    %497 = vmatprep.subr.mxu0 0.0
    %498 = vmatpush1.msra.mxu0 %v472
    %499 = vmatprep.subr.mxu0 0.0
    %500 = vmatpush1.msra.mxu0 %v471
    %501 = vmatprep.subr.mxu0 0.0
    %502 = vmatpush1.msra.mxu0 %v470
    %503 = vmatprep.subr.mxu0 0.0
    %504 = vmatpush1.msra.mxu0 %v469
    %505 = vmatprep.subr.mxu0 0.0
    %506 = vmatpush1.msra.mxu0 %v468
    %507 = vmatprep.subr.mxu0 0.0
    %508 = vmatpush1.msra.mxu0 %v467
    %509 = vmatprep.subr.mxu0 0.0
    %510 = vmatpush1.msra.mxu0 %v466
    %511 = vmatprep.subr.mxu0 0.0
    %512 = vmatpush1.msra.mxu0 %v465
    %513 = vmatprep.subr.mxu0 0.0
    %514 = vmatpush2.msra.mxu0 0.0
    %515 = vmatprep.subr.mxu0 0.0
    %516 = vmatpush2.msra.mxu0 0.0
    %517 = vmatprep.subr.mxu0 0.0
    %518 = vmatpush2.msra.mxu0 0.0
    %519 = vmatprep.subr.mxu0 0.0
    %520 = vmatpush2.msra.mxu0 0.0
    %521 = vmatprep.subr.mxu0 0.0
    %522 = vmatpush2.msra.mxu0 0.0
    %523 = vmatprep.subr.mxu0 0.0
    %524 = vmatpush2.msra.mxu0 0.0
    %525 = vmatprep.subr.mxu0 0.0
    %526 = vmatpush2.msra.mxu0 0.0
    %527 = vmatprep.subr.mxu0 0.0
    %528 = vmatpush2.msra.mxu0 0.0
    %529 = vmatprep.subr.mxu0 0.0
    %530 = vmatpush2.msra.mxu0 0.0
    %531 = vmatprep.subr.mxu0 0.0
    %532 = vmatpush2.msra.mxu0 0.0
    %533 = vmatprep.subr.mxu0 0.0
    %534 = vmatpush2.msra.mxu0 0.0
    %535 = vmatprep.subr.mxu0 0.0
    %536 = vmatpush2.msra.mxu0 0.0
    %537 = vmatprep.subr.mxu0 0.0
    %538 = vmatpush2.msra.mxu0 0.0
    %539 = vmatprep.subr.mxu0 0.0
    %540 = vmatpush2.msra.mxu0 0.0
    %541 = vmatprep.subr.mxu0 0.0
    %542 = vmatpush2.msra.mxu0 0.0
    %543 = vmatprep.subr.mxu0 0.0
    %544 = vmatpush2.msra.mxu0 0.0
    %545 = vmatprep.mubr.f32.mxu0 0.0
    %546 = vmatmul.mubr.f32.gmra.mxu0 %v446
    %v547 = vpop.f32.mrf.mxu0
    %v548 = vadd.f32 0.0, %v547
    %v549 = vpop.f32.mrf.mxu0
    %550 = vmatprep.mubr.f32.mxu0 0.0
    %551 = vmatmul.mubr.f32.gmra.mxu0 %v451
    %v552 = vpop.f32.mrf.mxu0
    %v553 = vadd.f32 0.0, %v552
    %v554 = vpop.f32.mrf.mxu0
    %555 = vmatprep.mubr.f32.mxu0 0.0
    %556 = vmatmul.mubr.f32.gmra.mxu0 %v456
    %v557 = vpop.f32.mrf.mxu0
    %v558 = vadd.f32 0.0, %v557
    %v559 = vpop.f32.mrf.mxu0
    %560 = vmatprep.mubr.f32.mxu0 0.0
    %561 = vmatmul.mubr.f32.gmra.mxu0 %v461
    %v562 = vpop.f32.mrf.mxu0
    %v563 = vadd.f32 0.0, %v562
    %v564 = vpop.f32.mrf.mxu0
    %565 = vdwg.mxu0
    %v566 = vadd.f32 %v349, %v548
    %v567 = vadd.f32 %v354, %v553
    %v568 = vadd.f32 %v359, %v558
    %v569 = vadd.f32 %v364, %v563
    %v570 = vld [vmem:[%s2] sm:$0x1]
    %v572 = vlaneseq
    %v573 = vshrl.u32 %v572, 7
    %v574 = vsub.s32 0, %v573
    %v575 = vrot.slane %v570, %v574
    %v577 = vadd.f32 %v566, %v575
    %v578 = vadd.f32 %v567, %v575
    %v579 = vadd.f32 %v568, %v575
    %v580 = vadd.f32 %v569, %v575
    %v581 = vmax.f32 %v577, 0.0
    %v582 = vmax.f32 %v578, 0.0
    %v583 = vmax.f32 %v579, 0.0
    %v584 = vmax.f32 %v580, 0.0
    %s585 = scalar_lea.vmem %s3, 128
    %v586 = vld [vmem:[%s585] sm:$0xff]
    %v587 = vld [vmem:[%s585 + $0x8] sm:$0xff]
    %v588 = vld [vmem:[%s585 + $0x10] sm:$0xff]
    %v589 = vld [vmem:[%s585 + $0x18] sm:$0xff]
    %v590 = vld [vmem:[%s585 + $0x20] sm:$0xff]
    %v591 = vld [vmem:[%s585 + $0x28] sm:$0xff]
    %v592 = vld [vmem:[%s585 + $0x30] sm:$0xff]
    %v593 = vld [vmem:[%s585 + $0x38] sm:$0xff]
    %v594 = vld [vmem:[%s585 + $0x40] sm:$0xff]
    %v595 = vld [vmem:[%s585 + $0x48] sm:$0xff]
    %v596 = vld [vmem:[%s585 + $0x50] sm:$0xff]
    %v597 = vld [vmem:[%s585 + $0x58] sm:$0xff]
    %v598 = vld [vmem:[%s585 + $0x60] sm:$0xff]
    %v599 = vld [vmem:[%s585 + $0x68] sm:$0xff]
    %v600 = vld [vmem:[%s585 + $0x70] sm:$0xff]
    %v601 = vld [vmem:[%s585 + $0x78] sm:$0xff]
    %602 = vmatprep.subr.mxu0 0.0
    %603 = vmatpush1.msra.mxu0 0.0
    %604 = vmatprep.subr.mxu0 0.0
    %605 = vmatpush1.msra.mxu0 0.0
    %606 = vmatprep.subr.mxu0 0.0
    %607 = vmatpush1.msra.mxu0 0.0
    %608 = vmatprep.subr.mxu0 0.0
    %609 = vmatpush1.msra.mxu0 0.0
    %610 = vmatprep.subr.mxu0 0.0
    %611 = vmatpush1.msra.mxu0 0.0
    %612 = vmatprep.subr.mxu0 0.0
    %613 = vmatpush1.msra.mxu0 0.0
    %614 = vmatprep.subr.mxu0 0.0
    %615 = vmatpush1.msra.mxu0 0.0
    %616 = vmatprep.subr.mxu0 0.0
    %617 = vmatpush1.msra.mxu0 0.0
    %618 = vmatprep.subr.mxu0 0.0
    %619 = vmatpush1.msra.mxu0 0.0
    %620 = vmatprep.subr.mxu0 0.0
    %621 = vmatpush1.msra.mxu0 0.0
    %622 = vmatprep.subr.mxu0 0.0
    %623 = vmatpush1.msra.mxu0 0.0
    %624 = vmatprep.subr.mxu0 0.0
    %625 = vmatpush1.msra.mxu0 0.0
    %626 = vmatprep.subr.mxu0 0.0
    %627 = vmatpush1.msra.mxu0 %v584
    %628 = vmatprep.subr.mxu0 0.0
    %629 = vmatpush1.msra.mxu0 %v583
    %630 = vmatprep.subr.mxu0 0.0
    %631 = vmatpush1.msra.mxu0 %v582
    %632 = vmatprep.subr.mxu0 0.0
    %633 = vmatpush1.msra.mxu0 %v581
    %634 = vmatprep.subr.mxu0 0.0
    %635 = vmatpush2.msra.mxu0 0.0
    %636 = vmatprep.subr.mxu0 0.0
    %637 = vmatpush2.msra.mxu0 0.0
    %638 = vmatprep.subr.mxu0 0.0
    %639 = vmatpush2.msra.mxu0 0.0
    %640 = vmatprep.subr.mxu0 0.0
    %641 = vmatpush2.msra.mxu0 0.0
    %642 = vmatprep.subr.mxu0 0.0
    %643 = vmatpush2.msra.mxu0 0.0
    %644 = vmatprep.subr.mxu0 0.0
    %645 = vmatpush2.msra.mxu0 0.0
    %646 = vmatprep.subr.mxu0 0.0
    %647 = vmatpush2.msra.mxu0 0.0
    %648 = vmatprep.subr.mxu0 0.0
    %649 = vmatpush2.msra.mxu0 0.0
    %650 = vmatprep.subr.mxu0 0.0
    %651 = vmatpush2.msra.mxu0 0.0
    %652 = vmatprep.subr.mxu0 0.0
    %653 = vmatpush2.msra.mxu0 0.0
    %654 = vmatprep.subr.mxu0 0.0
    %655 = vmatpush2.msra.mxu0 0.0
    %656 = vmatprep.subr.mxu0 0.0
    %657 = vmatpush2.msra.mxu0 0.0
    %658 = vmatprep.subr.mxu0 0.0
    %659 = vmatpush2.msra.mxu0 0.0
    %660 = vmatprep.subr.mxu0 0.0
    %661 = vmatpush2.msra.mxu0 0.0
    %662 = vmatprep.subr.mxu0 0.0
    %663 = vmatpush2.msra.mxu0 0.0
    %664 = vmatprep.subr.mxu0 0.0
    %665 = vmatpush2.msra.mxu0 0.0
    %666 = vmatprep.mubr.f32.mxu0 0.0
    %667 = vmatmul.mubr.f32.gmra.mxu0 %v85
    %v668 = vpop.f32.mrf.mxu0
    %v669 = vadd.f32 0.0, %v668
    %v670 = vpop.f32.mrf.mxu0
    %671 = vmatprep.mubr.f32.mxu0 0.0
    %672 = vmatmul.mubr.f32.gmra.mxu0 %v88
    %v673 = vpop.f32.mrf.mxu0
    %v674 = vadd.f32 0.0, %v673
    %v675 = vpop.f32.mrf.mxu0
    %676 = vmatprep.mubr.f32.mxu0 0.0
    %677 = vmatmul.mubr.f32.gmra.mxu0 %v91
    %v678 = vpop.f32.mrf.mxu0
    %v679 = vadd.f32 0.0, %v678
    %v680 = vpop.f32.mrf.mxu0
    %681 = vmatprep.mubr.f32.mxu0 0.0
    %682 = vmatmul.mubr.f32.gmra.mxu0 %v94
    %v683 = vpop.f32.mrf.mxu0
    %v684 = vadd.f32 0.0, %v683
    %v685 = vpop.f32.mrf.mxu0
    %686 = vdwg.mxu0
    %v687 = vld [vmem:[%s3] sm:$0xff]
    %v688 = vld [vmem:[%s3 + $0x8] sm:$0xff]
    %v689 = vld [vmem:[%s3 + $0x10] sm:$0xff]
    %v690 = vld [vmem:[%s3 + $0x18] sm:$0xff]
    %v691 = vld [vmem:[%s3 + $0x20] sm:$0xff]
    %v692 = vld [vmem:[%s3 + $0x28] sm:$0xff]
    %v693 = vld [vmem:[%s3 + $0x30] sm:$0xff]
    %v694 = vld [vmem:[%s3 + $0x38] sm:$0xff]
    %v695 = vld [vmem:[%s3 + $0x40] sm:$0xff]
    %v696 = vld [vmem:[%s3 + $0x48] sm:$0xff]
    %v697 = vld [vmem:[%s3 + $0x50] sm:$0xff]
    %v698 = vld [vmem:[%s3 + $0x58] sm:$0xff]
    %v699 = vld [vmem:[%s3 + $0x60] sm:$0xff]
    %v700 = vld [vmem:[%s3 + $0x68] sm:$0xff]
    %v701 = vld [vmem:[%s3 + $0x70] sm:$0xff]
    %v702 = vld [vmem:[%s3 + $0x78] sm:$0xff]
    %703 = vmatprep.subr.mxu0 0.0
    %704 = vmatpush1.msra.mxu0 %v702
    %705 = vmatprep.subr.mxu0 0.0
    %706 = vmatpush1.msra.mxu0 %v701
    %707 = vmatprep.subr.mxu0 0.0
    %708 = vmatpush1.msra.mxu0 %v700
    %709 = vmatprep.subr.mxu0 0.0
    %710 = vmatpush1.msra.mxu0 %v699
    %711 = vmatprep.subr.mxu0 0.0
    %712 = vmatpush1.msra.mxu0 %v698
    %713 = vmatprep.subr.mxu0 0.0
    %714 = vmatpush1.msra.mxu0 %v697
    %715 = vmatprep.subr.mxu0 0.0
    %716 = vmatpush1.msra.mxu0 %v696
    %717 = vmatprep.subr.mxu0 0.0
    %718 = vmatpush1.msra.mxu0 %v695
    %719 = vmatprep.subr.mxu0 0.0
    %720 = vmatpush1.msra.mxu0 %v694
    %721 = vmatprep.subr.mxu0 0.0
    %722 = vmatpush1.msra.mxu0 %v693
    %723 = vmatprep.subr.mxu0 0.0
    %724 = vmatpush1.msra.mxu0 %v692
    %725 = vmatprep.subr.mxu0 0.0
    %726 = vmatpush1.msra.mxu0 %v691
    %727 = vmatprep.subr.mxu0 0.0
    %728 = vmatpush1.msra.mxu0 %v690
    %729 = vmatprep.subr.mxu0 0.0
    %730 = vmatpush1.msra.mxu0 %v689
    %731 = vmatprep.subr.mxu0 0.0
    %732 = vmatpush1.msra.mxu0 %v688
    %733 = vmatprep.subr.mxu0 0.0
    %734 = vmatpush1.msra.mxu0 %v687
    %735 = vmatprep.subr.mxu0 0.0
    %736 = vmatpush2.msra.mxu0 0.0
    %737 = vmatprep.subr.mxu0 0.0
    %738 = vmatpush2.msra.mxu0 0.0
    %739 = vmatprep.subr.mxu0 0.0
    %740 = vmatpush2.msra.mxu0 0.0
    %741 = vmatprep.subr.mxu0 0.0
    %742 = vmatpush2.msra.mxu0 0.0
    %743 = vmatprep.subr.mxu0 0.0
    %744 = vmatpush2.msra.mxu0 0.0
    %745 = vmatprep.subr.mxu0 0.0
    %746 = vmatpush2.msra.mxu0 0.0
    %747 = vmatprep.subr.mxu0 0.0
    %748 = vmatpush2.msra.mxu0 0.0
    %749 = vmatprep.subr.mxu0 0.0
    %750 = vmatpush2.msra.mxu0 0.0
    %751 = vmatprep.subr.mxu0 0.0
    %752 = vmatpush2.msra.mxu0 0.0
    %753 = vmatprep.subr.mxu0 0.0
    %754 = vmatpush2.msra.mxu0 0.0
    %755 = vmatprep.subr.mxu0 0.0
    %756 = vmatpush2.msra.mxu0 0.0
    %757 = vmatprep.subr.mxu0 0.0
    %758 = vmatpush2.msra.mxu0 0.0
    %759 = vmatprep.subr.mxu0 0.0
    %760 = vmatpush2.msra.mxu0 0.0
    %761 = vmatprep.subr.mxu0 0.0
    %762 = vmatpush2.msra.mxu0 0.0
    %763 = vmatprep.subr.mxu0 0.0
    %764 = vmatpush2.msra.mxu0 0.0
    %765 = vmatprep.subr.mxu0 0.0
    %766 = vmatpush2.msra.mxu0 0.0
    %767 = vmatprep.mubr.f32.mxu0 0.0
    %768 = vmatmul.mubr.f32.gmra.mxu0 %v669
    %v769 = vpop.f32.mrf.mxu0
    %v770 = vadd.f32 0.0, %v769
    %v771 = vpop.f32.mrf.mxu0
    %772 = vmatprep.mubr.f32.mxu0 0.0
    %773 = vmatmul.mubr.f32.gmra.mxu0 %v674
    %v774 = vpop.f32.mrf.mxu0
    %v775 = vadd.f32 0.0, %v774
    %v776 = vpop.f32.mrf.mxu0
    %777 = vmatprep.mubr.f32.mxu0 0.0
    %778 = vmatmul.mubr.f32.gmra.mxu0 %v679
    %v779 = vpop.f32.mrf.mxu0
    %v780 = vadd.f32 0.0, %v779
    %v781 = vpop.f32.mrf.mxu0
    %782 = vmatprep.mubr.f32.mxu0 0.0
    %783 = vmatmul.mubr.f32.gmra.mxu0 %v684
    %v784 = vpop.f32.mrf.mxu0
    %v785 = vadd.f32 0.0, %v784
    %v786 = vpop.f32.mrf.mxu0
    %787 = vdwg.mxu0
    %788 = vmatprep.subr.mxu0 0.0
    %789 = vmatpush1.msra.mxu0 %v601
    %790 = vmatprep.subr.mxu0 0.0
    %791 = vmatpush1.msra.mxu0 %v600
    %792 = vmatprep.subr.mxu0 0.0
    %793 = vmatpush1.msra.mxu0 %v599
    %794 = vmatprep.subr.mxu0 0.0
    %795 = vmatpush1.msra.mxu0 %v598
    %796 = vmatprep.subr.mxu0 0.0
    %797 = vmatpush1.msra.mxu0 %v597
    %798 = vmatprep.subr.mxu0 0.0
    %799 = vmatpush1.msra.mxu0 %v596
    %800 = vmatprep.subr.mxu0 0.0
    %801 = vmatpush1.msra.mxu0 %v595
    %802 = vmatprep.subr.mxu0 0.0
    %803 = vmatpush1.msra.mxu0 %v594
    %804 = vmatprep.subr.mxu0 0.0
    %805 = vmatpush1.msra.mxu0 %v593
    %806 = vmatprep.subr.mxu0 0.0
    %807 = vmatpush1.msra.mxu0 %v592
    %808 = vmatprep.subr.mxu0 0.0
    %809 = vmatpush1.msra.mxu0 %v591
    %810 = vmatprep.subr.mxu0 0.0
    %811 = vmatpush1.msra.mxu0 %v590
    %812 = vmatprep.subr.mxu0 0.0
    %813 = vmatpush1.msra.mxu0 %v589
    %814 = vmatprep.subr.mxu0 0.0
    %815 = vmatpush1.msra.mxu0 %v588
    %816 = vmatprep.subr.mxu0 0.0
    %817 = vmatpush1.msra.mxu0 %v587
    %818 = vmatprep.subr.mxu0 0.0
    %819 = vmatpush1.msra.mxu0 %v586
    %820 = vmatprep.subr.mxu0 0.0
    %821 = vmatpush2.msra.mxu0 0.0
    %822 = vmatprep.subr.mxu0 0.0
    %823 = vmatpush2.msra.mxu0 0.0
    %824 = vmatprep.subr.mxu0 0.0
    %825 = vmatpush2.msra.mxu0 0.0
    %826 = vmatprep.subr.mxu0 0.0
    %827 = vmatpush2.msra.mxu0 0.0
    %828 = vmatprep.subr.mxu0 0.0
    %829 = vmatpush2.msra.mxu0 0.0
    %830 = vmatprep.subr.mxu0 0.0
    %831 = vmatpush2.msra.mxu0 0.0
    %832 = vmatprep.subr.mxu0 0.0
    %833 = vmatpush2.msra.mxu0 0.0
    %834 = vmatprep.subr.mxu0 0.0
    %835 = vmatpush2.msra.mxu0 0.0
    %836 = vmatprep.subr.mxu0 0.0
    %837 = vmatpush2.msra.mxu0 0.0
    %838 = vmatprep.subr.mxu0 0.0
    %839 = vmatpush2.msra.mxu0 0.0
    %840 = vmatprep.subr.mxu0 0.0
    %841 = vmatpush2.msra.mxu0 0.0
    %842 = vmatprep.subr.mxu0 0.0
    %843 = vmatpush2.msra.mxu0 0.0
    %844 = vmatprep.subr.mxu0 0.0
    %845 = vmatpush2.msra.mxu0 0.0
    %846 = vmatprep.subr.mxu0 0.0
    %847 = vmatpush2.msra.mxu0 0.0
    %848 = vmatprep.subr.mxu0 0.0
    %849 = vmatpush2.msra.mxu0 0.0
    %850 = vmatprep.subr.mxu0 0.0
    %851 = vmatpush2.msra.mxu0 0.0
    %852 = vmatprep.mubr.f32.mxu0 0.0
    %853 = vmatmul.mubr.f32.gmra.mxu0 %v581
    %v854 = vpop.f32.mrf.mxu0
    %v855 = vadd.f32 %v770, %v854
    %v856 = vpop.f32.mrf.mxu0
    %857 = vmatprep.mubr.f32.mxu0 0.0
    %858 = vmatmul.mubr.f32.gmra.mxu0 %v582
    %v859 = vpop.f32.mrf.mxu0
    %v860 = vadd.f32 %v775, %v859
    %v861 = vpop.f32.mrf.mxu0
    %862 = vmatprep.mubr.f32.mxu0 0.0
    %863 = vmatmul.mubr.f32.gmra.mxu0 %v583
    %v864 = vpop.f32.mrf.mxu0
    %v865 = vadd.f32 %v780, %v864
    %v866 = vpop.f32.mrf.mxu0
    %867 = vmatprep.mubr.f32.mxu0 0.0
    %868 = vmatmul.mubr.f32.gmra.mxu0 %v584
    %v869 = vpop.f32.mrf.mxu0
    %v870 = vadd.f32 %v785, %v869
    %v871 = vpop.f32.mrf.mxu0
    %872 = vdwg.mxu0
    %873 = vmatprep.subr.mxu0 0.0
    %874 = vmatpush1.msra.mxu0 0.0
    %875 = vmatprep.subr.mxu0 0.0
    %876 = vmatpush1.msra.mxu0 0.0
    %877 = vmatprep.subr.mxu0 0.0
    %878 = vmatpush1.msra.mxu0 0.0
    %879 = vmatprep.subr.mxu0 0.0
    %880 = vmatpush1.msra.mxu0 0.0
    %881 = vmatprep.subr.mxu0 0.0
    %882 = vmatpush1.msra.mxu0 0.0
    %883 = vmatprep.subr.mxu0 0.0
    %884 = vmatpush1.msra.mxu0 0.0
    %885 = vmatprep.subr.mxu0 0.0
    %886 = vmatpush1.msra.mxu0 0.0
    %887 = vmatprep.subr.mxu0 0.0
    %888 = vmatpush1.msra.mxu0 0.0
    %889 = vmatprep.subr.mxu0 0.0
    %890 = vmatpush1.msra.mxu0 0.0
    %891 = vmatprep.subr.mxu0 0.0
    %892 = vmatpush1.msra.mxu0 0.0
    %893 = vmatprep.subr.mxu0 0.0
    %894 = vmatpush1.msra.mxu0 0.0
    %895 = vmatprep.subr.mxu0 0.0
    %896 = vmatpush1.msra.mxu0 0.0
    %897 = vmatprep.subr.mxu0 0.0
    %898 = vmatpush1.msra.mxu0 %v584
    %899 = vmatprep.subr.mxu0 0.0
    %900 = vmatpush1.msra.mxu0 %v583
    %901 = vmatprep.subr.mxu0 0.0
    %902 = vmatpush1.msra.mxu0 %v582
    %903 = vmatprep.subr.mxu0 0.0
    %904 = vmatpush1.msra.mxu0 %v581
    %905 = vmatprep.subr.mxu0 0.0
    %906 = vmatpush2.msra.mxu0 0.0
    %907 = vmatprep.subr.mxu0 0.0
    %908 = vmatpush2.msra.mxu0 0.0
    %909 = vmatprep.subr.mxu0 0.0
    %910 = vmatpush2.msra.mxu0 0.0
    %911 = vmatprep.subr.mxu0 0.0
    %912 = vmatpush2.msra.mxu0 0.0
    %913 = vmatprep.subr.mxu0 0.0
    %914 = vmatpush2.msra.mxu0 0.0
    %915 = vmatprep.subr.mxu0 0.0
    %916 = vmatpush2.msra.mxu0 0.0
    %917 = vmatprep.subr.mxu0 0.0
    %918 = vmatpush2.msra.mxu0 0.0
    %919 = vmatprep.subr.mxu0 0.0
    %920 = vmatpush2.msra.mxu0 0.0
    %921 = vmatprep.subr.mxu0 0.0
    %922 = vmatpush2.msra.mxu0 0.0
    %923 = vmatprep.subr.mxu0 0.0
    %924 = vmatpush2.msra.mxu0 0.0
    %925 = vmatprep.subr.mxu0 0.0
    %926 = vmatpush2.msra.mxu0 0.0
    %927 = vmatprep.subr.mxu0 0.0
    %928 = vmatpush2.msra.mxu0 0.0
    %929 = vmatprep.subr.mxu0 0.0
    %930 = vmatpush2.msra.mxu0 0.0
    %931 = vmatprep.subr.mxu0 0.0
    %932 = vmatpush2.msra.mxu0 0.0
    %933 = vmatprep.subr.mxu0 0.0
    %934 = vmatpush2.msra.mxu0 0.0
    %935 = vmatprep.subr.mxu0 0.0
    %936 = vmatpush2.msra.mxu0 0.0
    %937 = vmatprep.mubr.f32.mxu0 0.0
    %938 = vmatmul.mubr.f32.gmra.mxu0 %v368
    %v939 = vpop.f32.mrf.mxu0
    %v940 = vadd.f32 0.0, %v939
    %v941 = vpop.f32.mrf.mxu0
    %942 = vmatprep.mubr.f32.mxu0 0.0
    %943 = vmatmul.mubr.f32.gmra.mxu0 %v371
    %v944 = vpop.f32.mrf.mxu0
    %v945 = vadd.f32 0.0, %v944
    %v946 = vpop.f32.mrf.mxu0
    %947 = vmatprep.mubr.f32.mxu0 0.0
    %948 = vmatmul.mubr.f32.gmra.mxu0 %v374
    %v949 = vpop.f32.mrf.mxu0
    %v950 = vadd.f32 0.0, %v949
    %v951 = vpop.f32.mrf.mxu0
    %952 = vmatprep.mubr.f32.mxu0 0.0
    %953 = vmatmul.mubr.f32.gmra.mxu0 %v377
    %v954 = vpop.f32.mrf.mxu0
    %v955 = vadd.f32 0.0, %v954
    %v956 = vpop.f32.mrf.mxu0
    %957 = vdwg.mxu0
    %s958 = scalar_lea.vmem %s3, 256
    %v959 = vld [vmem:[%s958] sm:$0xff]
    %v960 = vld [vmem:[%s958 + $0x8] sm:$0xff]
    %v961 = vld [vmem:[%s958 + $0x10] sm:$0xff]
    %v962 = vld [vmem:[%s958 + $0x18] sm:$0xff]
    %v963 = vld [vmem:[%s958 + $0x20] sm:$0xff]
    %v964 = vld [vmem:[%s958 + $0x28] sm:$0xff]
    %v965 = vld [vmem:[%s958 + $0x30] sm:$0xff]
    %v966 = vld [vmem:[%s958 + $0x38] sm:$0xff]
    %v967 = vld [vmem:[%s958 + $0x40] sm:$0xff]
    %v968 = vld [vmem:[%s958 + $0x48] sm:$0xff]
    %v969 = vld [vmem:[%s958 + $0x50] sm:$0xff]
    %v970 = vld [vmem:[%s958 + $0x58] sm:$0xff]
    %v971 = vld [vmem:[%s958 + $0x60] sm:$0xff]
    %v972 = vld [vmem:[%s958 + $0x68] sm:$0xff]
    %v973 = vld [vmem:[%s958 + $0x70] sm:$0xff]
    %v974 = vld [vmem:[%s958 + $0x78] sm:$0xff]
    %975 = vmatprep.subr.mxu0 0.0
    %976 = vmatpush1.msra.mxu0 %v974
    %977 = vmatprep.subr.mxu0 0.0
    %978 = vmatpush1.msra.mxu0 %v973
    %979 = vmatprep.subr.mxu0 0.0
    %980 = vmatpush1.msra.mxu0 %v972
    %981 = vmatprep.subr.mxu0 0.0
    %982 = vmatpush1.msra.mxu0 %v971
    %983 = vmatprep.subr.mxu0 0.0
    %984 = vmatpush1.msra.mxu0 %v970
    %985 = vmatprep.subr.mxu0 0.0
    %986 = vmatpush1.msra.mxu0 %v969
    %987 = vmatprep.subr.mxu0 0.0
    %988 = vmatpush1.msra.mxu0 %v968
    %989 = vmatprep.subr.mxu0 0.0
    %990 = vmatpush1.msra.mxu0 %v967
    %991 = vmatprep.subr.mxu0 0.0
    %992 = vmatpush1.msra.mxu0 %v966
    %993 = vmatprep.subr.mxu0 0.0
    %994 = vmatpush1.msra.mxu0 %v965
    %995 = vmatprep.subr.mxu0 0.0
    %996 = vmatpush1.msra.mxu0 %v964
    %997 = vmatprep.subr.mxu0 0.0
    %998 = vmatpush1.msra.mxu0 %v963
    %999 = vmatprep.subr.mxu0 0.0
    %1000 = vmatpush1.msra.mxu0 %v962
    %1001 = vmatprep.subr.mxu0 0.0
    %1002 = vmatpush1.msra.mxu0 %v961
    %1003 = vmatprep.subr.mxu0 0.0
    %1004 = vmatpush1.msra.mxu0 %v960
    %1005 = vmatprep.subr.mxu0 0.0
    %1006 = vmatpush1.msra.mxu0 %v959
    %1007 = vmatprep.subr.mxu0 0.0
    %1008 = vmatpush2.msra.mxu0 0.0
    %1009 = vmatprep.subr.mxu0 0.0
    %1010 = vmatpush2.msra.mxu0 0.0
    %1011 = vmatprep.subr.mxu0 0.0
    %1012 = vmatpush2.msra.mxu0 0.0
    %1013 = vmatprep.subr.mxu0 0.0
    %1014 = vmatpush2.msra.mxu0 0.0
    %1015 = vmatprep.subr.mxu0 0.0
    %1016 = vmatpush2.msra.mxu0 0.0
    %1017 = vmatprep.subr.mxu0 0.0
    %1018 = vmatpush2.msra.mxu0 0.0
    %1019 = vmatprep.subr.mxu0 0.0
    %1020 = vmatpush2.msra.mxu0 0.0
    %1021 = vmatprep.subr.mxu0 0.0
    %1022 = vmatpush2.msra.mxu0 0.0
    %1023 = vmatprep.subr.mxu0 0.0
    %1024 = vmatpush2.msra.mxu0 0.0
    %1025 = vmatprep.subr.mxu0 0.0
    %1026 = vmatpush2.msra.mxu0 0.0
    %1027 = vmatprep.subr.mxu0 0.0
    %1028 = vmatpush2.msra.mxu0 0.0
    %1029 = vmatprep.subr.mxu0 0.0
    %1030 = vmatpush2.msra.mxu0 0.0
    %1031 = vmatprep.subr.mxu0 0.0
    %1032 = vmatpush2.msra.mxu0 0.0
    %1033 = vmatprep.subr.mxu0 0.0
    %1034 = vmatpush2.msra.mxu0 0.0
    %1035 = vmatprep.subr.mxu0 0.0
    %1036 = vmatpush2.msra.mxu0 0.0
    %1037 = vmatprep.subr.mxu0 0.0
    %1038 = vmatpush2.msra.mxu0 0.0
    %1039 = vmatprep.mubr.f32.mxu0 0.0
    %1040 = vmatmul.mubr.f32.gmra.mxu0 %v940
    %v1041 = vpop.f32.mrf.mxu0
    %v1042 = vadd.f32 0.0, %v1041
    %v1043 = vpop.f32.mrf.mxu0
    %1044 = vmatprep.mubr.f32.mxu0 0.0
    %1045 = vmatmul.mubr.f32.gmra.mxu0 %v945
    %v1046 = vpop.f32.mrf.mxu0
    %v1047 = vadd.f32 0.0, %v1046
    %v1048 = vpop.f32.mrf.mxu0
    %1049 = vmatprep.mubr.f32.mxu0 0.0
    %1050 = vmatmul.mubr.f32.gmra.mxu0 %v950
    %v1051 = vpop.f32.mrf.mxu0
    %v1052 = vadd.f32 0.0, %v1051
    %v1053 = vpop.f32.mrf.mxu0
    %1054 = vmatprep.mubr.f32.mxu0 0.0
    %1055 = vmatmul.mubr.f32.gmra.mxu0 %v955
    %v1056 = vpop.f32.mrf.mxu0
    %v1057 = vadd.f32 0.0, %v1056
    %v1058 = vpop.f32.mrf.mxu0
    %1059 = vdwg.mxu0
    %v1060 = vadd.f32 %v855, %v1042
    %v1061 = vadd.f32 %v860, %v1047
    %v1062 = vadd.f32 %v865, %v1052
    %v1063 = vadd.f32 %v870, %v1057
    %v1064 = vld [vmem:[%s4] sm:$0x1]
    %v1066 = vlaneseq
    %v1067 = vshrl.u32 %v1066, 7
    %v1068 = vsub.s32 0, %v1067
    %v1069 = vrot.slane %v1064, %v1068
    %v1071 = vadd.f32 %v1060, %v1069
    %v1072 = vadd.f32 %v1061, %v1069
    %v1073 = vadd.f32 %v1062, %v1069
    %v1074 = vadd.f32 %v1063, %v1069
    %v1075 = vlaneseq
    %v1076 = vshrl.u32 %v1075, 7
    %v1077 = vadd.s32 %v1076, 8
    %v1078 = vadd.s32 %v1076, 16
    %v1079 = vadd.s32 %v1076, 24
    %vm1080 = vcmp.lt.s32.totalorder %v1076, 0
    %v1081 = vsub.s32 0, %v1076
    %v1082 = vsel %vm1080, %v1081, %v1076
    %v1083 = vshrl.u32 %v1082, 4
    %v1084 = vand.u32 %v1082, 15
    %v1085 = vsub.s32 0, %v1084
    %v1086 = vsel %vm1080, %v1085, %v1084
    %vm1087 = vcmp.lt.s32.totalorder %v1077, 0
    %v1088 = vsub.s32 0, %v1077
    %v1089 = vsel %vm1087, %v1088, %v1077
    %v1090 = vshrl.u32 %v1089, 4
    %v1091 = vand.u32 %v1089, 15
    %v1092 = vsub.s32 0, %v1091
    %v1093 = vsel %vm1087, %v1092, %v1091
    %vm1094 = vcmp.lt.s32.totalorder %v1078, 0
    %v1095 = vsub.s32 0, %v1078
    %v1096 = vsel %vm1094, %v1095, %v1078
    %v1097 = vshrl.u32 %v1096, 4
    %v1098 = vand.u32 %v1096, 15
    %v1099 = vsub.s32 0, %v1098
    %v1100 = vsel %vm1094, %v1099, %v1098
    %vm1101 = vcmp.lt.s32.totalorder %v1079, 0
    %v1102 = vsub.s32 0, %v1079
    %v1103 = vsel %vm1101, %v1102, %v1079
    %v1104 = vshrl.u32 %v1103, 4
    %v1105 = vand.u32 %v1103, 15
    %v1106 = vsub.s32 0, %v1105
    %v1107 = vsel %vm1101, %v1106, %v1105
    %vm1108 = vcmp.ne.s32.totalorder %v1086, 0
    %vm1109 = vcmp.ne.s32.totalorder %v1093, 0
    %vm1110 = vcmp.ne.s32.totalorder %v1100, 0
    %vm1111 = vcmp.ne.s32.totalorder %v1107, 0
    %vm1112 = vcmp.lt.s32.totalorder %v1086, 0
    %vm1113 = vcmp.lt.s32.totalorder %v1093, 0
    %vm1114 = vcmp.lt.s32.totalorder %v1100, 0
    %vm1115 = vcmp.lt.s32.totalorder %v1107, 0
    %vm1116 = vmand %vm1112, %vm1108
    %vm1117 = vmand %vm1113, %vm1109
    %vm1118 = vmand %vm1114, %vm1110
    %vm1119 = vmand %vm1115, %vm1111
    %v1120 = vadd.s32 %v1086, 16
    %v1121 = vadd.s32 %v1093, 16
    %v1122 = vadd.s32 %v1100, 16
    %v1123 = vadd.s32 %v1107, 16
    %v1124 = vsel %vm1116, %v1120, %v1086
    %v1125 = vsel %vm1117, %v1121, %v1093
    %v1126 = vsel %vm1118, %v1122, %v1100
    %v1127 = vsel %vm1119, %v1123, %v1107
    %vm1128 = vcmp.eq.s32.totalorder %v1124, 0
    %vm1129 = vcmp.eq.s32.totalorder %v1125, 0
    %vm1130 = vcmp.eq.s32.totalorder %v1126, 0
    %vm1131 = vcmp.eq.s32.totalorder %v1127, 0
    %vm1132 = vcmp.eq.s32.totalorder %v1124, 15
    %vm1133 = vcmp.eq.s32.totalorder %v1125, 15
    %vm1134 = vcmp.eq.s32.totalorder %v1126, 15
    %vm1135 = vcmp.eq.s32.totalorder %v1127, 15
    %v1136 = vlaneseq
    %v1137 = vand.u32 %v1136, 127
    %vm1138 = vcmp.lt.s32.totalorder %v1137, 8
    %vm1139 = vcmp.ge.s32.totalorder %v1137, 120
    %v1140 = vld [vmem:[%s6] sm:$0xff]
    %v1141 = vld [vmem:[%s6 + $0x8] sm:$0xff]
    %v1142 = vld [vmem:[%s6 + $0x10] sm:$0xff]
    %v1143 = vld [vmem:[%s6 + $0x18] sm:$0xff]
    %v1144 = vld [vmem:[%s6 + $0x20] sm:$0xff]
    %v1145 = vld [vmem:[%s6 + $0x28] sm:$0xff]
    %v1146 = vld [vmem:[%s6 + $0x30] sm:$0xff]
    %v1147 = vld [vmem:[%s6 + $0x38] sm:$0xff]
    %v1148 = vld [vmem:[%s6 + $0x40] sm:$0xff]
    %v1149 = vld [vmem:[%s6 + $0x48] sm:$0xff]
    %v1150 = vld [vmem:[%s6 + $0x50] sm:$0xff]
    %v1151 = vld [vmem:[%s6 + $0x58] sm:$0xff]
    %v1152 = vld [vmem:[%s6 + $0x60] sm:$0xff]
    %v1153 = vld [vmem:[%s6 + $0x68] sm:$0xff]
    %v1154 = vld [vmem:[%s6 + $0x70] sm:$0xff]
    %v1155 = vld [vmem:[%s6 + $0x78] sm:$0xff]
    %1156 = vmatprep.subr.mxu0 0.0
    %1157 = vmatpush1.msra.mxu0 %v1155
    %1158 = vmatprep.subr.mxu0 0.0
    %1159 = vmatpush1.msra.mxu0 %v1154
    %1160 = vmatprep.subr.mxu0 0.0
    %1161 = vmatpush1.msra.mxu0 %v1153
    %1162 = vmatprep.subr.mxu0 0.0
    %1163 = vmatpush1.msra.mxu0 %v1152
    %1164 = vmatprep.subr.mxu0 0.0
    %1165 = vmatpush1.msra.mxu0 %v1151
    %1166 = vmatprep.subr.mxu0 0.0
    %1167 = vmatpush1.msra.mxu0 %v1150
    %1168 = vmatprep.subr.mxu0 0.0
    %1169 = vmatpush1.msra.mxu0 %v1149
    %1170 = vmatprep.subr.mxu0 0.0
    %1171 = vmatpush1.msra.mxu0 %v1148
    %1172 = vmatprep.subr.mxu0 0.0
    %1173 = vmatpush1.msra.mxu0 %v1147
    %1174 = vmatprep.subr.mxu0 0.0
    %1175 = vmatpush1.msra.mxu0 %v1146
    %1176 = vmatprep.subr.mxu0 0.0
    %1177 = vmatpush1.msra.mxu0 %v1145
    %1178 = vmatprep.subr.mxu0 0.0
    %1179 = vmatpush1.msra.mxu0 %v1144
    %1180 = vmatprep.subr.mxu0 0.0
    %1181 = vmatpush1.msra.mxu0 %v1143
    %1182 = vmatprep.subr.mxu0 0.0
    %1183 = vmatpush1.msra.mxu0 %v1142
    %1184 = vmatprep.subr.mxu0 0.0
    %1185 = vmatpush1.msra.mxu0 %v1141
    %1186 = vmatprep.subr.mxu0 0.0
    %1187 = vmatpush1.msra.mxu0 %v1140
    %1188 = vmatprep.subr.mxu0 0.0
    %1189 = vmatpush2.msra.mxu0 0.0
    %1190 = vmatprep.subr.mxu0 0.0
    %1191 = vmatpush2.msra.mxu0 0.0
    %1192 = vmatprep.subr.mxu0 0.0
    %1193 = vmatpush2.msra.mxu0 0.0
    %1194 = vmatprep.subr.mxu0 0.0
    %1195 = vmatpush2.msra.mxu0 0.0
    %1196 = vmatprep.subr.mxu0 0.0
    %1197 = vmatpush2.msra.mxu0 0.0
    %1198 = vmatprep.subr.mxu0 0.0
    %1199 = vmatpush2.msra.mxu0 0.0
    %1200 = vmatprep.subr.mxu0 0.0
    %1201 = vmatpush2.msra.mxu0 0.0
    %1202 = vmatprep.subr.mxu0 0.0
    %1203 = vmatpush2.msra.mxu0 0.0
    %1204 = vmatprep.subr.mxu0 0.0
    %1205 = vmatpush2.msra.mxu0 0.0
    %1206 = vmatprep.subr.mxu0 0.0
    %1207 = vmatpush2.msra.mxu0 0.0
    %1208 = vmatprep.subr.mxu0 0.0
    %1209 = vmatpush2.msra.mxu0 0.0
    %1210 = vmatprep.subr.mxu0 0.0
    %1211 = vmatpush2.msra.mxu0 0.0
    %1212 = vmatprep.subr.mxu0 0.0
    %1213 = vmatpush2.msra.mxu0 0.0
    %1214 = vmatprep.subr.mxu0 0.0
    %1215 = vmatpush2.msra.mxu0 0.0
    %1216 = vmatprep.subr.mxu0 0.0
    %1217 = vmatpush2.msra.mxu0 0.0
    %1218 = vmatprep.subr.mxu0 0.0
    %1219 = vmatpush2.msra.mxu0 0.0
    %1220 = vmatprep.mubr.f32.mxu0 0.0
    %1221 = vmatmul.mubr.f32.gmra.mxu0 %v1071
    %v1222 = vpop.f32.mrf.mxu0
    %v1223 = vadd.f32 0.0, %v1222
    %v1224 = vpop.f32.mrf.mxu0
    %1225 = vmatprep.mubr.f32.mxu0 0.0
    %1226 = vmatmul.mubr.f32.gmra.mxu0 %v1072
    %v1227 = vpop.f32.mrf.mxu0
    %v1228 = vadd.f32 0.0, %v1227
    %v1229 = vpop.f32.mrf.mxu0
    %1230 = vmatprep.mubr.f32.mxu0 0.0
    %1231 = vmatmul.mubr.f32.gmra.mxu0 %v1073
    %v1232 = vpop.f32.mrf.mxu0
    %v1233 = vadd.f32 0.0, %v1232
    %v1234 = vpop.f32.mrf.mxu0
    %1235 = vmatprep.mubr.f32.mxu0 0.0
    %1236 = vmatmul.mubr.f32.gmra.mxu0 %v1074
    %v1237 = vpop.f32.mrf.mxu0
    %v1238 = vadd.f32 0.0, %v1237
    %v1239 = vpop.f32.mrf.mxu0
    %1240 = vdwg.mxu0
    %v1241 = vsel %vm1138, 1, 0
    %vm1242 = vcmp.eq.s32.totalorder %v1241, 1
    %v1243 = vsel %vm1242, -1e+30, %v1223
    %v1244 = vsel %vm1242, -1e+30, %v1228
    %v1245 = vsel %vm1242, -1e+30, %v1233
    %v1246 = vsel %vm1242, -1e+30, %v1238
    %s1247 = scalar_lea.vmem %s6, 128
    %v1248 = vld [vmem:[%s1247] sm:$0xff]
    %v1249 = vld [vmem:[%s1247 + $0x8] sm:$0xff]
    %v1250 = vld [vmem:[%s1247 + $0x10] sm:$0xff]
    %v1251 = vld [vmem:[%s1247 + $0x18] sm:$0xff]
    %v1252 = vld [vmem:[%s1247 + $0x20] sm:$0xff]
    %v1253 = vld [vmem:[%s1247 + $0x28] sm:$0xff]
    %v1254 = vld [vmem:[%s1247 + $0x30] sm:$0xff]
    %v1255 = vld [vmem:[%s1247 + $0x38] sm:$0xff]
    %v1256 = vld [vmem:[%s1247 + $0x40] sm:$0xff]
    %v1257 = vld [vmem:[%s1247 + $0x48] sm:$0xff]
    %v1258 = vld [vmem:[%s1247 + $0x50] sm:$0xff]
    %v1259 = vld [vmem:[%s1247 + $0x58] sm:$0xff]
    %v1260 = vld [vmem:[%s1247 + $0x60] sm:$0xff]
    %v1261 = vld [vmem:[%s1247 + $0x68] sm:$0xff]
    %v1262 = vld [vmem:[%s1247 + $0x70] sm:$0xff]
    %v1263 = vld [vmem:[%s1247 + $0x78] sm:$0xff]
    %1264 = vmatprep.subr.mxu0 0.0
    %1265 = vmatpush1.msra.mxu0 %v1263
    %1266 = vmatprep.subr.mxu0 0.0
    %1267 = vmatpush1.msra.mxu0 %v1262
    %1268 = vmatprep.subr.mxu0 0.0
    %1269 = vmatpush1.msra.mxu0 %v1261
    %1270 = vmatprep.subr.mxu0 0.0
    %1271 = vmatpush1.msra.mxu0 %v1260
    %1272 = vmatprep.subr.mxu0 0.0
    %1273 = vmatpush1.msra.mxu0 %v1259
    %1274 = vmatprep.subr.mxu0 0.0
    %1275 = vmatpush1.msra.mxu0 %v1258
    %1276 = vmatprep.subr.mxu0 0.0
    %1277 = vmatpush1.msra.mxu0 %v1257
    %1278 = vmatprep.subr.mxu0 0.0
    %1279 = vmatpush1.msra.mxu0 %v1256
    %1280 = vmatprep.subr.mxu0 0.0
    %1281 = vmatpush1.msra.mxu0 %v1255
    %1282 = vmatprep.subr.mxu0 0.0
    %1283 = vmatpush1.msra.mxu0 %v1254
    %1284 = vmatprep.subr.mxu0 0.0
    %1285 = vmatpush1.msra.mxu0 %v1253
    %1286 = vmatprep.subr.mxu0 0.0
    %1287 = vmatpush1.msra.mxu0 %v1252
    %1288 = vmatprep.subr.mxu0 0.0
    %1289 = vmatpush1.msra.mxu0 %v1251
    %1290 = vmatprep.subr.mxu0 0.0
    %1291 = vmatpush1.msra.mxu0 %v1250
    %1292 = vmatprep.subr.mxu0 0.0
    %1293 = vmatpush1.msra.mxu0 %v1249
    %1294 = vmatprep.subr.mxu0 0.0
    %1295 = vmatpush1.msra.mxu0 %v1248
    %1296 = vmatprep.subr.mxu0 0.0
    %1297 = vmatpush2.msra.mxu0 0.0
    %1298 = vmatprep.subr.mxu0 0.0
    %1299 = vmatpush2.msra.mxu0 0.0
    %1300 = vmatprep.subr.mxu0 0.0
    %1301 = vmatpush2.msra.mxu0 0.0
    %1302 = vmatprep.subr.mxu0 0.0
    %1303 = vmatpush2.msra.mxu0 0.0
    %1304 = vmatprep.subr.mxu0 0.0
    %1305 = vmatpush2.msra.mxu0 0.0
    %1306 = vmatprep.subr.mxu0 0.0
    %1307 = vmatpush2.msra.mxu0 0.0
    %1308 = vmatprep.subr.mxu0 0.0
    %1309 = vmatpush2.msra.mxu0 0.0
    %1310 = vmatprep.subr.mxu0 0.0
    %1311 = vmatpush2.msra.mxu0 0.0
    %1312 = vmatprep.subr.mxu0 0.0
    %1313 = vmatpush2.msra.mxu0 0.0
    %1314 = vmatprep.subr.mxu0 0.0
    %1315 = vmatpush2.msra.mxu0 0.0
    %1316 = vmatprep.subr.mxu0 0.0
    %1317 = vmatpush2.msra.mxu0 0.0
    %1318 = vmatprep.subr.mxu0 0.0
    %1319 = vmatpush2.msra.mxu0 0.0
    %1320 = vmatprep.subr.mxu0 0.0
    %1321 = vmatpush2.msra.mxu0 0.0
    %1322 = vmatprep.subr.mxu0 0.0
    %1323 = vmatpush2.msra.mxu0 0.0
    %1324 = vmatprep.subr.mxu0 0.0
    %1325 = vmatpush2.msra.mxu0 0.0
    %1326 = vmatprep.subr.mxu0 0.0
    %1327 = vmatpush2.msra.mxu0 0.0
    %1328 = vmatprep.mubr.f32.mxu0 0.0
    %1329 = vmatmul.mubr.f32.gmra.mxu0 %v1071
    %v1330 = vpop.f32.mrf.mxu0
    %v1331 = vadd.f32 0.0, %v1330
    %v1332 = vpop.f32.mrf.mxu0
    %1333 = vmatprep.mubr.f32.mxu0 0.0
    %1334 = vmatmul.mubr.f32.gmra.mxu0 %v1072
    %v1335 = vpop.f32.mrf.mxu0
    %v1336 = vadd.f32 0.0, %v1335
    %v1337 = vpop.f32.mrf.mxu0
    %1338 = vmatprep.mubr.f32.mxu0 0.0
    %1339 = vmatmul.mubr.f32.gmra.mxu0 %v1073
    %v1340 = vpop.f32.mrf.mxu0
    %v1341 = vadd.f32 0.0, %v1340
    %v1342 = vpop.f32.mrf.mxu0
    %1343 = vmatprep.mubr.f32.mxu0 0.0
    %1344 = vmatmul.mubr.f32.gmra.mxu0 %v1074
    %v1345 = vpop.f32.mrf.mxu0
    %v1346 = vadd.f32 0.0, %v1345
    %v1347 = vpop.f32.mrf.mxu0
    %1348 = vdwg.mxu0
    %v1349 = vsel %vm1139, 1, 0
    %vm1350 = vcmp.eq.s32.totalorder %v1349, 1
    %v1351 = vsel %vm1350, -1e+30, %v1331
    %v1352 = vsel %vm1350, -1e+30, %v1336
    %v1353 = vsel %vm1350, -1e+30, %v1341
    %v1354 = vsel %vm1350, -1e+30, %v1346
    %v1355 = vmax.f32 %v1071, %v1243
    %v1356 = vmax.f32 %v1072, %v1244
    %v1357 = vmax.f32 %v1073, %v1245
    %v1358 = vmax.f32 %v1074, %v1246
    %v1359 = vmax.f32 %v1355, %v1351
    %v1360 = vmax.f32 %v1356, %v1352
    %v1361 = vmax.f32 %v1357, %v1353
    %v1362 = vmax.f32 %v1358, %v1354
    %1363 = vmatprep.subr.mxu0 0.0
    %1364 = vmatpush1.msra.mxu0 0.0
    %1365 = vmatprep.subr.mxu0 0.0
    %1366 = vmatpush1.msra.mxu0 0.0
    %1367 = vmatprep.subr.mxu0 0.0
    %1368 = vmatpush1.msra.mxu0 0.0
    %1369 = vmatprep.subr.mxu0 0.0
    %1370 = vmatpush1.msra.mxu0 0.0
    %1371 = vmatprep.subr.mxu0 0.0
    %1372 = vmatpush1.msra.mxu0 0.0
    %1373 = vmatprep.subr.mxu0 0.0
    %1374 = vmatpush1.msra.mxu0 0.0
    %1375 = vmatprep.subr.mxu0 0.0
    %1376 = vmatpush1.msra.mxu0 0.0
    %1377 = vmatprep.subr.mxu0 0.0
    %1378 = vmatpush1.msra.mxu0 0.0
    %1379 = vmatprep.subr.mxu0 0.0
    %1380 = vmatpush1.msra.mxu0 0.0
    %1381 = vmatprep.subr.mxu0 0.0
    %1382 = vmatpush1.msra.mxu0 0.0
    %1383 = vmatprep.subr.mxu0 0.0
    %1384 = vmatpush1.msra.mxu0 0.0
    %1385 = vmatprep.subr.mxu0 0.0
    %1386 = vmatpush1.msra.mxu0 0.0
    %1387 = vmatprep.subr.mxu0 0.0
    %1388 = vmatpush1.msra.mxu0 %v1362
    %1389 = vmatprep.subr.mxu0 0.0
    %1390 = vmatpush1.msra.mxu0 %v1361
    %1391 = vmatprep.subr.mxu0 0.0
    %1392 = vmatpush1.msra.mxu0 %v1360
    %1393 = vmatprep.subr.mxu0 0.0
    %1394 = vmatpush1.msra.mxu0 %v1359
    %1395 = vmatprep.subr.mxu0 0.0
    %1396 = vmatpush2.msra.mxu0 0.0
    %1397 = vmatprep.subr.mxu0 0.0
    %1398 = vmatpush2.msra.mxu0 0.0
    %1399 = vmatprep.subr.mxu0 0.0
    %1400 = vmatpush2.msra.mxu0 0.0
    %1401 = vmatprep.subr.mxu0 0.0
    %1402 = vmatpush2.msra.mxu0 0.0
    %1403 = vmatprep.subr.mxu0 0.0
    %1404 = vmatpush2.msra.mxu0 0.0
    %1405 = vmatprep.subr.mxu0 0.0
    %1406 = vmatpush2.msra.mxu0 0.0
    %1407 = vmatprep.subr.mxu0 0.0
    %1408 = vmatpush2.msra.mxu0 0.0
    %1409 = vmatprep.subr.mxu0 0.0
    %1410 = vmatpush2.msra.mxu0 0.0
    %1411 = vmatprep.subr.mxu0 0.0
    %1412 = vmatpush2.msra.mxu0 0.0
    %1413 = vmatprep.subr.mxu0 0.0
    %1414 = vmatpush2.msra.mxu0 0.0
    %1415 = vmatprep.subr.mxu0 0.0
    %1416 = vmatpush2.msra.mxu0 0.0
    %1417 = vmatprep.subr.mxu0 0.0
    %1418 = vmatpush2.msra.mxu0 0.0
    %1419 = vmatprep.subr.mxu0 0.0
    %1420 = vmatpush2.msra.mxu0 0.0
    %1421 = vmatprep.subr.mxu0 0.0
    %1422 = vmatpush2.msra.mxu0 0.0
    %1423 = vmatprep.subr.mxu0 0.0
    %1424 = vmatpush2.msra.mxu0 0.0
    %1425 = vmatprep.subr.mxu0 0.0
    %1426 = vmatpush2.msra.mxu0 0.0
    %1427 = vmatprep.mubr.f32.mxu0 0.0
    %1428 = vmatmul.mubr.f32.gmra.mxu0 %v85
    %v1429 = vpop.f32.mrf.mxu0
    %v1430 = vadd.f32 0.0, %v1429
    %v1431 = vpop.f32.mrf.mxu0
    %1432 = vmatprep.mubr.f32.mxu0 0.0
    %1433 = vmatmul.mubr.f32.gmra.mxu0 %v88
    %v1434 = vpop.f32.mrf.mxu0
    %v1435 = vadd.f32 0.0, %v1434
    %v1436 = vpop.f32.mrf.mxu0
    %1437 = vmatprep.mubr.f32.mxu0 0.0
    %1438 = vmatmul.mubr.f32.gmra.mxu0 %v91
    %v1439 = vpop.f32.mrf.mxu0
    %v1440 = vadd.f32 0.0, %v1439
    %v1441 = vpop.f32.mrf.mxu0
    %1442 = vmatprep.mubr.f32.mxu0 0.0
    %1443 = vmatmul.mubr.f32.gmra.mxu0 %v94
    %v1444 = vpop.f32.mrf.mxu0
    %v1445 = vadd.f32 0.0, %v1444
    %v1446 = vpop.f32.mrf.mxu0
    %1447 = vdwg.mxu0
    %v1448 = vsel %vm1128, 1, 0
    %v1449 = vsel %vm1129, 1, 0
    %v1450 = vsel %vm1130, 1, 0
    %v1451 = vsel %vm1131, 1, 0
    %vm1452 = vcmp.eq.s32.totalorder %v1448, 1
    %vm1453 = vcmp.eq.s32.totalorder %v1449, 1
    %vm1454 = vcmp.eq.s32.totalorder %v1450, 1
    %vm1455 = vcmp.eq.s32.totalorder %v1451, 1
    %v1456 = vsel %vm1452, -1e+30, %v1430
    %v1457 = vsel %vm1453, -1e+30, %v1435
    %v1458 = vsel %vm1454, -1e+30, %v1440
    %v1459 = vsel %vm1455, -1e+30, %v1445
    %1460 = vmatprep.subr.mxu0 0.0
    %1461 = vmatpush1.msra.mxu0 0.0
    %1462 = vmatprep.subr.mxu0 0.0
    %1463 = vmatpush1.msra.mxu0 0.0
    %1464 = vmatprep.subr.mxu0 0.0
    %1465 = vmatpush1.msra.mxu0 0.0
    %1466 = vmatprep.subr.mxu0 0.0
    %1467 = vmatpush1.msra.mxu0 0.0
    %1468 = vmatprep.subr.mxu0 0.0
    %1469 = vmatpush1.msra.mxu0 0.0
    %1470 = vmatprep.subr.mxu0 0.0
    %1471 = vmatpush1.msra.mxu0 0.0
    %1472 = vmatprep.subr.mxu0 0.0
    %1473 = vmatpush1.msra.mxu0 0.0
    %1474 = vmatprep.subr.mxu0 0.0
    %1475 = vmatpush1.msra.mxu0 0.0
    %1476 = vmatprep.subr.mxu0 0.0
    %1477 = vmatpush1.msra.mxu0 0.0
    %1478 = vmatprep.subr.mxu0 0.0
    %1479 = vmatpush1.msra.mxu0 0.0
    %1480 = vmatprep.subr.mxu0 0.0
    %1481 = vmatpush1.msra.mxu0 0.0
    %1482 = vmatprep.subr.mxu0 0.0
    %1483 = vmatpush1.msra.mxu0 0.0
    %1484 = vmatprep.subr.mxu0 0.0
    %1485 = vmatpush1.msra.mxu0 %v1362
    %1486 = vmatprep.subr.mxu0 0.0
    %1487 = vmatpush1.msra.mxu0 %v1361
    %1488 = vmatprep.subr.mxu0 0.0
    %1489 = vmatpush1.msra.mxu0 %v1360
    %1490 = vmatprep.subr.mxu0 0.0
    %1491 = vmatpush1.msra.mxu0 %v1359
    %1492 = vmatprep.subr.mxu0 0.0
    %1493 = vmatpush2.msra.mxu0 0.0
    %1494 = vmatprep.subr.mxu0 0.0
    %1495 = vmatpush2.msra.mxu0 0.0
    %1496 = vmatprep.subr.mxu0 0.0
    %1497 = vmatpush2.msra.mxu0 0.0
    %1498 = vmatprep.subr.mxu0 0.0
    %1499 = vmatpush2.msra.mxu0 0.0
    %1500 = vmatprep.subr.mxu0 0.0
    %1501 = vmatpush2.msra.mxu0 0.0
    %1502 = vmatprep.subr.mxu0 0.0
    %1503 = vmatpush2.msra.mxu0 0.0
    %1504 = vmatprep.subr.mxu0 0.0
    %1505 = vmatpush2.msra.mxu0 0.0
    %1506 = vmatprep.subr.mxu0 0.0
    %1507 = vmatpush2.msra.mxu0 0.0
    %1508 = vmatprep.subr.mxu0 0.0
    %1509 = vmatpush2.msra.mxu0 0.0
    %1510 = vmatprep.subr.mxu0 0.0
    %1511 = vmatpush2.msra.mxu0 0.0
    %1512 = vmatprep.subr.mxu0 0.0
    %1513 = vmatpush2.msra.mxu0 0.0
    %1514 = vmatprep.subr.mxu0 0.0
    %1515 = vmatpush2.msra.mxu0 0.0
    %1516 = vmatprep.subr.mxu0 0.0
    %1517 = vmatpush2.msra.mxu0 0.0
    %1518 = vmatprep.subr.mxu0 0.0
    %1519 = vmatpush2.msra.mxu0 0.0
    %1520 = vmatprep.subr.mxu0 0.0
    %1521 = vmatpush2.msra.mxu0 0.0
    %1522 = vmatprep.subr.mxu0 0.0
    %1523 = vmatpush2.msra.mxu0 0.0
    %1524 = vmatprep.mubr.f32.mxu0 0.0
    %1525 = vmatmul.mubr.f32.gmra.mxu0 %v368
    %v1526 = vpop.f32.mrf.mxu0
    %v1527 = vadd.f32 0.0, %v1526
    %v1528 = vpop.f32.mrf.mxu0
    %1529 = vmatprep.mubr.f32.mxu0 0.0
    %1530 = vmatmul.mubr.f32.gmra.mxu0 %v371
    %v1531 = vpop.f32.mrf.mxu0
    %v1532 = vadd.f32 0.0, %v1531
    %v1533 = vpop.f32.mrf.mxu0
    %1534 = vmatprep.mubr.f32.mxu0 0.0
    %1535 = vmatmul.mubr.f32.gmra.mxu0 %v374
    %v1536 = vpop.f32.mrf.mxu0
    %v1537 = vadd.f32 0.0, %v1536
    %v1538 = vpop.f32.mrf.mxu0
    %1539 = vmatprep.mubr.f32.mxu0 0.0
    %1540 = vmatmul.mubr.f32.gmra.mxu0 %v377
    %v1541 = vpop.f32.mrf.mxu0
    %v1542 = vadd.f32 0.0, %v1541
    %v1543 = vpop.f32.mrf.mxu0
    %1544 = vdwg.mxu0
    %v1545 = vsel %vm1132, 1, 0
    %v1546 = vsel %vm1133, 1, 0
    %v1547 = vsel %vm1134, 1, 0
    %v1548 = vsel %vm1135, 1, 0
    %vm1549 = vcmp.eq.s32.totalorder %v1545, 1
    %vm1550 = vcmp.eq.s32.totalorder %v1546, 1
    %vm1551 = vcmp.eq.s32.totalorder %v1547, 1
    %vm1552 = vcmp.eq.s32.totalorder %v1548, 1
    %v1553 = vsel %vm1549, -1e+30, %v1527
    %v1554 = vsel %vm1550, -1e+30, %v1532
    %v1555 = vsel %vm1551, -1e+30, %v1537
    %v1556 = vsel %vm1552, -1e+30, %v1542
    %v1557 = vmax.f32 %v1359, %v1456
    %v1558 = vmax.f32 %v1360, %v1457
    %v1559 = vmax.f32 %v1361, %v1458
    %v1560 = vmax.f32 %v1362, %v1459
    %v1561 = vmax.f32 %v1557, %v1553
    %v1562 = vmax.f32 %v1558, %v1554
    %v1563 = vmax.f32 %v1559, %v1555
    %v1564 = vmax.f32 %v1560, %v1556
    %v1565 = vld [vmem:[%s7] sm:$0xff]
    %v1566 = vld [vmem:[%s7 + $0x8] sm:$0xff]
    %v1567 = vld [vmem:[%s7 + $0x10] sm:$0xff]
    %v1568 = vld [vmem:[%s7 + $0x18] sm:$0xff]
    %v1569 = vld [vmem:[%s7 + $0x20] sm:$0xff]
    %v1570 = vld [vmem:[%s7 + $0x28] sm:$0xff]
    %v1571 = vld [vmem:[%s7 + $0x30] sm:$0xff]
    %v1572 = vld [vmem:[%s7 + $0x38] sm:$0xff]
    %v1573 = vld [vmem:[%s7 + $0x40] sm:$0xff]
    %v1574 = vld [vmem:[%s7 + $0x48] sm:$0xff]
    %v1575 = vld [vmem:[%s7 + $0x50] sm:$0xff]
    %v1576 = vld [vmem:[%s7 + $0x58] sm:$0xff]
    %v1577 = vld [vmem:[%s7 + $0x60] sm:$0xff]
    %v1578 = vld [vmem:[%s7 + $0x68] sm:$0xff]
    %v1579 = vld [vmem:[%s7 + $0x70] sm:$0xff]
    %v1580 = vld [vmem:[%s7 + $0x78] sm:$0xff]
    %1581 = vmatprep.subr.mxu0 0.0
    %1582 = vmatpush1.msra.mxu0 %v1580
    %1583 = vmatprep.subr.mxu0 0.0
    %1584 = vmatpush1.msra.mxu0 %v1579
    %1585 = vmatprep.subr.mxu0 0.0
    %1586 = vmatpush1.msra.mxu0 %v1578
    %1587 = vmatprep.subr.mxu0 0.0
    %1588 = vmatpush1.msra.mxu0 %v1577
    %1589 = vmatprep.subr.mxu0 0.0
    %1590 = vmatpush1.msra.mxu0 %v1576
    %1591 = vmatprep.subr.mxu0 0.0
    %1592 = vmatpush1.msra.mxu0 %v1575
    %1593 = vmatprep.subr.mxu0 0.0
    %1594 = vmatpush1.msra.mxu0 %v1574
    %1595 = vmatprep.subr.mxu0 0.0
    %1596 = vmatpush1.msra.mxu0 %v1573
    %1597 = vmatprep.subr.mxu0 0.0
    %1598 = vmatpush1.msra.mxu0 %v1572
    %1599 = vmatprep.subr.mxu0 0.0
    %1600 = vmatpush1.msra.mxu0 %v1571
    %1601 = vmatprep.subr.mxu0 0.0
    %1602 = vmatpush1.msra.mxu0 %v1570
    %1603 = vmatprep.subr.mxu0 0.0
    %1604 = vmatpush1.msra.mxu0 %v1569
    %1605 = vmatprep.subr.mxu0 0.0
    %1606 = vmatpush1.msra.mxu0 %v1568
    %1607 = vmatprep.subr.mxu0 0.0
    %1608 = vmatpush1.msra.mxu0 %v1567
    %1609 = vmatprep.subr.mxu0 0.0
    %1610 = vmatpush1.msra.mxu0 %v1566
    %1611 = vmatprep.subr.mxu0 0.0
    %1612 = vmatpush1.msra.mxu0 %v1565
    %1613 = vmatprep.subr.mxu0 0.0
    %1614 = vmatpush2.msra.mxu0 0.0
    %1615 = vmatprep.subr.mxu0 0.0
    %1616 = vmatpush2.msra.mxu0 0.0
    %1617 = vmatprep.subr.mxu0 0.0
    %1618 = vmatpush2.msra.mxu0 0.0
    %1619 = vmatprep.subr.mxu0 0.0
    %1620 = vmatpush2.msra.mxu0 0.0
    %1621 = vmatprep.subr.mxu0 0.0
    %1622 = vmatpush2.msra.mxu0 0.0
    %1623 = vmatprep.subr.mxu0 0.0
    %1624 = vmatpush2.msra.mxu0 0.0
    %1625 = vmatprep.subr.mxu0 0.0
    %1626 = vmatpush2.msra.mxu0 0.0
    %1627 = vmatprep.subr.mxu0 0.0
    %1628 = vmatpush2.msra.mxu0 0.0
    %1629 = vmatprep.subr.mxu0 0.0
    %1630 = vmatpush2.msra.mxu0 0.0
    %1631 = vmatprep.subr.mxu0 0.0
    %1632 = vmatpush2.msra.mxu0 0.0
    %1633 = vmatprep.subr.mxu0 0.0
    %1634 = vmatpush2.msra.mxu0 0.0
    %1635 = vmatprep.subr.mxu0 0.0
    %1636 = vmatpush2.msra.mxu0 0.0
    %1637 = vmatprep.subr.mxu0 0.0
    %1638 = vmatpush2.msra.mxu0 0.0
    %1639 = vmatprep.subr.mxu0 0.0
    %1640 = vmatpush2.msra.mxu0 0.0
    %1641 = vmatprep.subr.mxu0 0.0
    %1642 = vmatpush2.msra.mxu0 0.0
    %1643 = vmatprep.subr.mxu0 0.0
    %1644 = vmatpush2.msra.mxu0 0.0
    %1645 = vmatprep.mubr.f32.mxu0 0.0
    %1646 = vmatmul.mubr.f32.gmra.mxu0 %v49
    %v1647 = vpop.f32.mrf.mxu0
    %v1648 = vadd.f32 0.0, %v1647
    %v1649 = vpop.f32.mrf.mxu0
    %1650 = vmatprep.mubr.f32.mxu0 0.0
    %1651 = vmatmul.mubr.f32.gmra.mxu0 %v50
    %v1652 = vpop.f32.mrf.mxu0
    %v1653 = vadd.f32 0.0, %v1652
    %v1654 = vpop.f32.mrf.mxu0
    %1655 = vmatprep.mubr.f32.mxu0 0.0
    %1656 = vmatmul.mubr.f32.gmra.mxu0 %v51
    %v1657 = vpop.f32.mrf.mxu0
    %v1658 = vadd.f32 0.0, %v1657
    %v1659 = vpop.f32.mrf.mxu0
    %1660 = vmatprep.mubr.f32.mxu0 0.0
    %1661 = vmatmul.mubr.f32.gmra.mxu0 %v52
    %v1662 = vpop.f32.mrf.mxu0
    %v1663 = vadd.f32 0.0, %v1662
    %v1664 = vpop.f32.mrf.mxu0
    %1665 = vdwg.mxu0
    %v1666 = vadd.f32 %v1561, %v1648
    %v1667 = vadd.f32 %v1562, %v1653
    %v1668 = vadd.f32 %v1563, %v1658
    %v1669 = vadd.f32 %v1564, %v1663
    %v1670 = vld [vmem:[%s9] sm:$0xff]
    %v1671 = vld [vmem:[%s9 + $0x8] sm:$0xff]
    %v1672 = vld [vmem:[%s8] sm:$0x1]
    %v1674 = vlaneseq
    %v1675 = vshrl.u32 %v1674, 7
    %v1676 = vsub.s32 0, %v1675
    %v1677 = vrot.slane %v1672, %v1676
    %v1680 = vsel %vm83, %v1670, 0
    %v1683 = vsel %vm83, %v1671, 0
    %1685 = vmatprep.subr.mxu0 0.0
    %1686 = vmatpush1.msra.mxu0 0.0
    %1687 = vmatprep.subr.mxu0 0.0
    %1688 = vmatpush1.msra.mxu0 0.0
    %1689 = vmatprep.subr.mxu0 0.0
    %1690 = vmatpush1.msra.mxu0 0.0
    %1691 = vmatprep.subr.mxu0 0.0
    %1692 = vmatpush1.msra.mxu0 0.0
    %1693 = vmatprep.subr.mxu0 0.0
    %1694 = vmatpush1.msra.mxu0 0.0
    %1695 = vmatprep.subr.mxu0 0.0
    %1696 = vmatpush1.msra.mxu0 0.0
    %1697 = vmatprep.subr.mxu0 0.0
    %1698 = vmatpush1.msra.mxu0 0.0
    %1699 = vmatprep.subr.mxu0 0.0
    %1700 = vmatpush1.msra.mxu0 0.0
    %1701 = vmatprep.subr.mxu0 0.0
    %1702 = vmatpush1.msra.mxu0 0.0
    %1703 = vmatprep.subr.mxu0 0.0
    %1704 = vmatpush1.msra.mxu0 0.0
    %1705 = vmatprep.subr.mxu0 0.0
    %1706 = vmatpush1.msra.mxu0 0.0
    %1707 = vmatprep.subr.mxu0 0.0
    %1708 = vmatpush1.msra.mxu0 0.0
    %1709 = vmatprep.subr.mxu0 0.0
    %1710 = vmatpush1.msra.mxu0 %v1669
    %1711 = vmatprep.subr.mxu0 0.0
    %1712 = vmatpush1.msra.mxu0 %v1668
    %1713 = vmatprep.subr.mxu0 0.0
    %1714 = vmatpush1.msra.mxu0 %v1667
    %1715 = vmatprep.subr.mxu0 0.0
    %1716 = vmatpush1.msra.mxu0 %v1666
    %1717 = vmatprep.subr.mxu0 0.0
    %1718 = vmatpush2.msra.mxu0 0.0
    %1719 = vmatprep.subr.mxu0 0.0
    %1720 = vmatpush2.msra.mxu0 0.0
    %1721 = vmatprep.subr.mxu0 0.0
    %1722 = vmatpush2.msra.mxu0 0.0
    %1723 = vmatprep.subr.mxu0 0.0
    %1724 = vmatpush2.msra.mxu0 0.0
    %1725 = vmatprep.subr.mxu0 0.0
    %1726 = vmatpush2.msra.mxu0 0.0
    %1727 = vmatprep.subr.mxu0 0.0
    %1728 = vmatpush2.msra.mxu0 0.0
    %1729 = vmatprep.subr.mxu0 0.0
    %1730 = vmatpush2.msra.mxu0 0.0
    %1731 = vmatprep.subr.mxu0 0.0
    %1732 = vmatpush2.msra.mxu0 0.0
    %1733 = vmatprep.subr.mxu0 0.0
    %1734 = vmatpush2.msra.mxu0 0.0
    %1735 = vmatprep.subr.mxu0 0.0
    %1736 = vmatpush2.msra.mxu0 0.0
    %1737 = vmatprep.subr.mxu0 0.0
    %1738 = vmatpush2.msra.mxu0 0.0
    %1739 = vmatprep.subr.mxu0 0.0
    %1740 = vmatpush2.msra.mxu0 0.0
    %1741 = vmatprep.subr.mxu0 0.0
    %1742 = vmatpush2.msra.mxu0 0.0
    %1743 = vmatprep.subr.mxu0 0.0
    %1744 = vmatpush2.msra.mxu0 0.0
    %1745 = vmatprep.subr.mxu0 0.0
    %1746 = vmatpush2.msra.mxu0 0.0
    %1747 = vmatprep.subr.mxu0 0.0
    %1748 = vmatpush2.msra.mxu0 0.0
    %1749 = vmatprep.mubr.f32.mxu0 0.0
    %1750 = vmatmul.mubr.f32.gmra.mxu0 %v1680
    %v1751 = vpop.f32.mrf.mxu0
    %v1752 = vadd.f32 %v1677, %v1751
    %v1753 = vpop.f32.mrf.mxu0
    %1754 = vmatprep.mubr.f32.mxu0 0.0
    %1755 = vmatmul.mubr.f32.gmra.mxu0 %v1683
    %v1756 = vpop.f32.mrf.mxu0
    %v1757 = vadd.f32 %v1677, %v1756
    %v1758 = vpop.f32.mrf.mxu0
    %1759 = vdwg.mxu0
    %1760 = vst [vmem:[%s10] sm:$0xff] %v1752
    %1761 = vst [vmem:[%s10 + $0x8] sm:$0xff] %v1757
    // Predicated region
    $region46: #{block_forward.1} parent=1 // pred_check
      _
    $region47: #{block_forward.1} parent=1 // pred_check_branch
      %1763 = sbr.rel (0) target = $region49
    $region48: #{block_forward.1} parent=1 // pred_region
      _
    $region49: #{block_forward.1} parent=1 // pred_fallthru
      _
    // Predicated region
    $region50: #{block_forward.1} parent=1 // pred_check
      _
    $region51: #{block_forward.1} parent=1 // pred_check_branch
      %1765 = sbr.rel (0) target = $region53
    $region52: #{block_forward.1} parent=1 // pred_region
      _
    $region53: #{block_forward.1} parent=1 // pred_fallthru
      _
    %1766 = vsyncpa [#allocation3], 1

</llo_original>
